<compile_context>
chip_gen: v5e
topology: v5e:2x2
jax: 0.10.0
libtpu: 0.0.40
codegen_flags: <defaults>
</compile_context>

<pallas_src>
import jax
import jax.numpy as jnp
from jax import lax
from jax.experimental import pallas as pl
from jax.experimental.pallas import tpu as pltpu

# ---------------- small synthetic config (shapes consistent with the module) ----------
VOCAB      = 256
HIDDEN     = 64
N_HEADS    = 4
N_KV_HEADS = 2
HEAD_DIM   = HIDDEN // N_HEADS          # 16
INTER      = 128
N_LAYERS   = 2
SEQ        = 8
RMS_EPS    = 1e-6
LN_EPS     = 1e-5                        # ChameleonLayerNorm eps
ROPE_THETA = 10000.0

Q_SIZE   = N_HEADS * HEAD_DIM            # 64
KV_SIZE  = N_KV_HEADS * HEAD_DIM         # 32
QKV_OUT  = Q_SIZE + 2 * KV_SIZE          # 128
REP      = N_HEADS // N_KV_HEADS         # GQA replication factor
SCALE    = HEAD_DIM ** -0.5
MASK_VAL = -0.7 * float(jnp.finfo(jnp.float32).max)

# Row layout of the packed per-layer norm-parameter block (NORM_ROWS, HIDDEN):
#   row 0            : input_layernorm weight            (H lanes)
#   row 1            : post_attention_layernorm weight   (H lanes)
#   rows 2 .. 2+nH   : q_norm weight, one head per row   (first HEAD_DIM lanes)
#   rows    .. +nH   : q_norm bias
#   rows    .. +nKV  : k_norm weight
#   rows    .. +nKV  : k_norm bias
R_IN, R_POST = 0, 1
R_QW = 2
R_QB = R_QW + N_HEADS                    # 6
R_KW = R_QB + N_HEADS                    # 10
R_KB = R_KW + N_KV_HEADS                 # 12
NORM_ROWS = R_KB + N_KV_HEADS            # 14


# ------------------------------------ fused kernel -------------------------------------
def _chameleon_stack_kernel(
    # inputs (order matches in_specs)
    x_in_ref,                      # (T, H)            f32   token embeddings
    cos_ref,                       # (T, D)            f32   [cos | cos]
    sin_ref,                       # (T, D)            f32   [-sin | sin] (rotate-half sign folded)
    norms_ref,                     # (NORM_ROWS, H)    f32   packed per-layer norm params
    qkv_w_ref,                     # (H, QKV_OUT)      bf16
    o_w_ref,                       # (Q_SIZE, H)       bf16
    gup_w_ref,                     # (H, 2*INTER)      bf16
    down_w_ref,                    # (INTER, H)        bf16
    final_ln_ref,                  # (1, H)            f32
    # output
    out_ref,                       # (T, H)            f32   final hidden states
    # VMEM scratch carried across grid (layer) steps
    x_sc, res_sc,                  # (T, H)            f32   hidden / residual carries
    mask_sc,                       # (1, T, T)         f32   causal mask (built once)
):
    l = pl.program_id(0)
    t = x_in_ref.shape[0]

    @pl.when(l == 0)
    def _init():
        # residual is None for layer 0: residual := hidden_states, no real add.
        x_sc[...]   = x_in_ref[...]
        res_sc[...] = jnp.zeros_like(res_sc)
        # causal mask built once, reused by every layer (hoisted off the per-layer VPU path)
        row = lax.broadcasted_iota(jnp.int32, (t, t), 0)
        col = lax.broadcasted_iota(jnp.int32, (t, t), 1)
        mask_sc[...] = (col <= row).astype(jnp.float32)[None]

    # ------- unpack the single per-layer small-param block (one DMA per layer) -------
    sp       = norms_ref[...]                         # (NORM_ROWS, H)
    in_ln    = sp[R_IN:R_IN + 1, :]                   # (1, H)
    post_ln  = sp[R_POST:R_POST + 1, :]               # (1, H)
    qw3      = sp[R_QW:R_QB, :HEAD_DIM]               # (nH, D)
    qb3      = sp[R_QB:R_KW, :HEAD_DIM]               # (nH, D)
    kw3      = sp[R_KW:R_KB, :HEAD_DIM]               # (nKV, D)
    kb3      = sp[R_KB:,     :HEAD_DIM]               # (nKV, D)

    cos = cos_ref[...]                                # (T, D)
    sin = sin_ref[...]                                # (T, D), sign already folded

    def rmsnorm(v, w):
        return v * lax.rsqrt(jnp.mean(v * v, axis=-1, keepdims=True) + RMS_EPS) * w

    def ln_heads(parts):
        # per-(token, head) LayerNorm statistics on (T, D) lane slices, then stack to
        # a head-batched (n_heads, T, D) tensor for slab-level affine/RoPE/attention.
        outs = []
        for xh in parts:
            mu  = jnp.mean(xh, axis=-1, keepdims=True)
            xc  = xh - mu
            var = jnp.mean(xc * xc, axis=-1, keepdims=True)
            outs.append(xc * lax.rsqrt(var + LN_EPS))
        return jnp.stack(outs, axis=0)                # (n_heads, T, D)

    def affine_rope(xn, w3, b3):
        # ChameleonLayerNorm affine + neox RoPE, applied to all heads at once.
        xa  = xn * w3[:, None, :] + b3[:, None, :]    # (n, T, D)
        # rotate-half for all heads with one slice pair + one concat.
        # TODO(synk): at real head_dim=128 use pltpu.roll(xa, HEAD_DIM//2, axis=-1).
        rot = jnp.concatenate([xa[..., HEAD_DIM // 2:], xa[..., :HEAD_DIM // 2]], axis=-1)
        return xa * cos[None] + rot * sin[None]       # (n, T, D)

    # ---------------- input RMSNorm (fused residual add) ----------------
    resid  = x_sc[...] + res_sc[...]                  # new residual (zero add only at l==0)
    hidden = rmsnorm(resid, in_ln)

    # ---------------- attention ----------------
    qkv = jnp.dot(hidden.astype(jnp.bfloat16), qkv_w_ref[...],
                  preferred_element_type=jnp.float32)               # (T, QKV_OUT) f32

    q_parts = [qkv[:, h * HEAD_DIM:(h + 1) * HEAD_DIM] for h in range(N_HEADS)]
    k_parts = [qkv[:, Q_SIZE + h * HEAD_DIM:Q_SIZE + (h + 1) * HEAD_DIM]
               for h in range(N_KV_HEADS)]
    v_parts = [qkv[:, Q_SIZE + KV_SIZE + h * HEAD_DIM:
                      Q_SIZE + KV_SIZE + (h + 1) * HEAD_DIM]
               for h in range(N_KV_HEADS)]

    qr = affine_rope(ln_heads(q_parts), qw3, qb3) * SCALE            # (nH, T, D)
    kr = affine_rope(ln_heads(k_parts), kw3, kb3)                    # (nKV, T, D)

    # GQA: expand K/V to query heads by indexing the shared KV head (h // REP).
    kb = jnp.stack([kr[h // REP] for h in range(N_HEADS)], axis=0)   # (nH, T, D)
    vb = jnp.stack([v_parts[h // REP] for h in range(N_HEADS)], axis=0)

    # Head-batched bf16 attention matmuls (f32 accumulation), bounded score live range.
    s = jnp.einsum('hqd,hkd->hqk', qr.astype(jnp.bfloat16), kb.astype(jnp.bfloat16),
                   preferred_element_type=jnp.float32)               # (nH, T, T)
    s = jnp.where(mask_sc[...] > 0.0, s, MASK_VAL)
    m = jnp.max(s, axis=-1, keepdims=True)
    p = jnp.exp(s - m)
    p = p * pl.reciprocal(jnp.sum(p, axis=-1, keepdims=True), approx=True)
    o = jnp.einsum('hqk,hkd->hqd', p.astype(jnp.bfloat16), vb.astype(jnp.bfloat16),
                   preferred_element_type=jnp.float32)               # (nH, T, D)
    attn = jnp.concatenate([o[h] for h in range(N_HEADS)], axis=-1)  # (T, nH*D) lane-dense

    attn = jnp.dot(attn.astype(jnp.bfloat16), o_w_ref[...],
                   preferred_element_type=jnp.float32)               # (T, H)

    # ---------------- post-attention RMSNorm + MLP ----------------
    resid2  = attn + resid
    hidden2 = rmsnorm(resid2, post_ln)
    gate_up = jnp.dot(hidden2.astype(jnp.bfloat16), gup_w_ref[...],
                      preferred_element_type=jnp.float32)            # (T, 2*INTER)
    g, u = gate_up[:, :INTER], gate_up[:, INTER:]
    act  = g * jax.nn.sigmoid(g) * u
    mlp  = jnp.dot(act.astype(jnp.bfloat16), down_w_ref[...],
                   preferred_element_type=jnp.float32)               # (T, H)

    # carry to next layer (stays in VMEM, no HBM round-trip)
    x_sc[...]   = mlp
    res_sc[...] = resid2

    @pl.when(l == pl.num_programs(0) - 1)
    def _finalize():
        out_ref[...] = rmsnorm(mlp + resid2, final_ln_ref[...])      # final model.norm


# ------------------------------------ wrapper ------------------------------------------
def _whole(shape):
    zeros = (0,) * len(shape)
    return pl.BlockSpec(shape, lambda l, _z=zeros: _z)


def _per_layer(shape):
    # leading (layer) dim is size-1 and squeezed away in the kernel view
    zeros = (0,) * len(shape)
    return pl.BlockSpec((pl.Squeezed(),) + shape, lambda l, _z=zeros: (l,) + _z)


def _pack_norm_params(params):
    small = jnp.zeros((N_LAYERS, NORM_ROWS, HIDDEN), jnp.float32)
    small = small.at[:, R_IN, :].set(params["in_ln_w"][:, 0, :])
    small = small.at[:, R_POST, :].set(params["post_ln_w"][:, 0, :])
    small = small.at[:, R_QW:R_QB, :HEAD_DIM].set(params["q_norm_w"])
    small = small.at[:, R_QB:R_KW, :HEAD_DIM].set(params["q_norm_b"])
    small = small.at[:, R_KW:R_KB, :HEAD_DIM].set(params["k_norm_w"])
    small = small.at[:, R_KB:,     :HEAD_DIM].set(params["k_norm_b"])
    return small


def chameleon_forward(params, input_ids, positions):
    t = input_ids.shape[0]
    x = jnp.take(params["embed"], input_ids, axis=0)                # (T, H) f32
    cos, sin = rope_cos_sin(positions)                              # (T, D/2) f32
    # full-width RoPE tables with the rotate-half sign folded in (wrapper-side, once)
    cos_f = jnp.concatenate([cos, cos], axis=-1)                    # (T, D)
    sin_s = jnp.concatenate([-sin, sin], axis=-1)                   # (T, D)
    norms = _pack_norm_params(params)                               # (L, NORM_ROWS, H)

    grid_spec = pltpu.PrefetchScalarGridSpec(
        num_scalar_prefetch=0,
        grid=(N_LAYERS,),
        in_specs=[
            _whole((t, HIDDEN)),                      # x (embeddings)
            _whole((t, HEAD_DIM)),                    # cos (expanded)
            _whole((t, HEAD_DIM)),                    # sin (expanded, sign folded)
            _per_layer((NORM_ROWS, HIDDEN)),          # packed per-layer norm params
            _per_layer((HIDDEN, QKV_OUT)),            # qkv_proj weight (bf16)
            _per_layer((Q_SIZE, HIDDEN)),             # o_proj weight (bf16)
            _per_layer((HIDDEN, 2 * INTER)),          # gate_up_proj weight (bf16)
            _per_layer((INTER, HIDDEN)),              # down_proj weight (bf16)
            _whole((1, HIDDEN)),                      # final model.norm weight
        ],
        out_specs=_whole((t, HIDDEN)),
        scratch_shapes=[pltpu.VMEM((t, HIDDEN), jnp.float32),       # hidden-state carry
                        pltpu.VMEM((t, HIDDEN), jnp.float32),       # residual carry
                        pltpu.VMEM((1, t, t), jnp.float32)],        # causal mask (built once)
    )

    return pl.pallas_call(
        _chameleon_stack_kernel,
        out_shape=jax.ShapeDtypeStruct((t, HIDDEN), jnp.float32),
        grid_spec=grid_spec,
        compiler_params=pltpu.CompilerParams(
            dimension_semantics=("arbitrary",),       # sequential layer carry in scratch
            vmem_limit_bytes=32 * 1024 * 1024),       # v5e default scoped VMEM is only 16 MiB
    )(x, cos_f, sin_s, norms,
      params["qkv_w"], params["o_w"], params["gate_up_w"], params["down_w"],
      params["final_norm_w"])


# ------------------------------ parameter initialization -------------------------------
def init_params(key):
    def rnd(k, shape, scale=0.02):
        return (scale * jax.random.normal(k, shape)).astype(jnp.float32)

    keys = jax.random.split(key, 2 + N_LAYERS)
    per_layer = []
    for i in range(N_LAYERS):
        lk = jax.random.split(keys[2 + i], 10)
        per_layer.append(dict(
            in_ln_w=1.0 + rnd(lk[0], (1, HIDDEN), 0.1),
            qkv_w=rnd(lk[1], (HIDDEN, QKV_OUT)),
            q_norm_w=1.0 + rnd(lk[2], (N_HEADS, HEAD_DIM), 0.1),
            q_norm_b=rnd(lk[3], (N_HEADS, HEAD_DIM), 0.1),
            k_norm_w=1.0 + rnd(lk[4], (N_KV_HEADS, HEAD_DIM), 0.1),
            k_norm_b=rnd(lk[5], (N_KV_HEADS, HEAD_DIM), 0.1),
            o_w=rnd(lk[6], (Q_SIZE, HIDDEN)),
            post_ln_w=1.0 + rnd(lk[7], (1, HIDDEN), 0.1),
            gate_up_w=rnd(lk[8], (HIDDEN, 2 * INTER)),
            down_w=rnd(lk[9], (INTER, HIDDEN)),
        ))

    def stack(name, dtype=jnp.float32):
        return jnp.stack([lp[name] for lp in per_layer], axis=0).astype(dtype)

    return {
        "embed": rnd(keys[0], (VOCAB, HIDDEN)),
        "final_norm_w": 1.0 + rnd(keys[1], (1, HIDDEN), 0.1),
        "in_ln_w": stack("in_ln_w"),
        "qkv_w": stack("qkv_w", jnp.bfloat16),        # MXU weights stored bf16
        "q_norm_w": stack("q_norm_w"),
        "q_norm_b": stack("q_norm_b"),
        "k_norm_w": stack("k_norm_w"),
        "k_norm_b": stack("k_norm_b"),
        "o_w": stack("o_w", jnp.bfloat16),
        "post_ln_w": stack("post_ln_w"),
        "gate_up_w": stack("gate_up_w", jnp.bfloat16),
        "down_w": stack("down_w", jnp.bfloat16),
    }


def rope_cos_sin(positions):
    inv_freq = 1.0 / (ROPE_THETA ** (
        jnp.arange(0, HEAD_DIM, 2, dtype=jnp.float32) / HEAD_DIM))
    freqs = positions.astype(jnp.float32)[:, None] * inv_freq[None, :]
    return jnp.cos(freqs), jnp.sin(freqs)             # (T, HEAD_DIM // 2)


# --------------------------- pure-JAX reference (sanity check) -------------------------
def _reference_forward(params, input_ids, positions):
    t = input_ids.shape[0]
    x = jnp.take(params["embed"], input_ids, axis=0)
    residual = jnp.zeros_like(x)
    cos, sin = rope_cos_sin(positions)
    mask = jnp.tril(jnp.ones((t, t), bool))

    def bdot(a, b):   # mirror kernel numerics: bf16 MXU inputs, f32 accumulation
        return jnp.dot(a.astype(jnp.bfloat16), b.astype(jnp.bfloat16),
                       preferred_element_type=jnp.float32)

    def rms(v, w):
        return v * lax.rsqrt(jnp.mean(v * v, -1, keepdims=True) + RMS_EPS) * w

    def qk_ln_rope(v, w, b, n_heads):
        v = v.reshape(t, n_heads, HEAD_DIM)
        mu = jnp.mean(v, -1, keepdims=True)
        vc = v - mu
        var = jnp.mean(vc * vc, -1, keepdims=True)
        v = vc * lax.rsqrt(var + LN_EPS) * w + b
        x1, x2 = v[..., :HEAD_DIM // 2], v[..., HEAD_DIM // 2:]
        c, s = cos[:, None, :], sin[:, None, :]
        return jnp.concatenate([x1 * c - x2 * s, x2 * c + x1 * s], -1)

    for i in range(N_LAYERS):
        h = residual + x
        residual = h
        n = rms(h, params["in_ln_w"][i])
        qkv = bdot(n, params["qkv_w"][i])
        q = qkv[:, :Q_SIZE]
        k = qkv[:, Q_SIZE:Q_SIZE + KV_SIZE]
        v = qkv[:, Q_SIZE + KV_SIZE:]
        qh = qk_ln_rope(q, params["q_norm_w"][i], params["q_norm_b"][i], N_HEADS) * SCALE
        kh = qk_ln_rope(k, params["k_norm_w"][i], params["k_norm_b"][i], N_KV_HEADS)
        vh = v.reshape(t, N_KV_HEADS, HEAD_DIM)
        kh = jnp.repeat(kh, REP, axis=1)
        vh = jnp.repeat(vh, REP, axis=1)
        s = jnp.einsum("qhd,khd->hqk", qh.astype(jnp.bfloat16), kh.astype(jnp.bfloat16),
                       preferred_element_type=jnp.float32)
        s = jnp.where(mask[None], s, MASK_VAL)
        p = jax.nn.softmax(s, -1)
        o = jnp.einsum("hqk,khd->qhd", p.astype(jnp.bfloat16), vh.astype(jnp.bfloat16),
                       preferred_element_type=jnp.float32).reshape(t, Q_SIZE)
        x = bdot(o, params["o_w"][i])
        h = residual + x
        residual = h
        n = rms(h, params["post_ln_w"][i])
        gu = bdot(n, params["gate_up_w"][i])
        g, u = gu[:, :INTER], gu[:, INTER:]
        x = bdot(g * jax.nn.sigmoid(g) * u, params["down_w"][i])
    return rms(residual + x, params["final_norm_w"])


# --------------------------------------- main ------------------------------------------
if __name__ == "__main__":
    key = jax.random.PRNGKey(0)
    k_param, k_ids = jax.random.split(key)
    params = init_params(k_param)
    input_ids = jax.random.randint(k_ids, (SEQ,), 0, VOCAB, dtype=jnp.int32)
    positions = jnp.arange(SEQ, dtype=jnp.int32)

    fwd = jax.jit(chameleon_forward)
    out = jax.block_until_ready(fwd(params, input_ids, positions))

    ref = _reference_forward(params, input_ids, positions)
    assert out.shape == (SEQ, HIDDEN) and out.dtype == jnp.float32
    max_err = float(jnp.max(jnp.abs(out - ref)))
    # tolerance covers approx-reciprocal softmax + bf16 MXU rounding-order differences
    assert jnp.allclose(out, ref, atol=2e-2, rtol=2e-2), \
        f"mismatch vs pure-JAX reference (max abs err {max_err:.3e})"
    print("KERNEL_OK")
</pallas_src>

<mosaic_0001>
module attributes {stable_mosaic.version = 11 : i64} {
  func.func @_chameleon_stack_kernel(%arg0: i32, %arg1: memref<8x64xf32, #tpu.memory_space<vmem>>, %arg2: memref<8x16xf32, #tpu.memory_space<vmem>>, %arg3: memref<8x16xf32, #tpu.memory_space<vmem>>, %arg4: memref<1x14x64xf32, #tpu.memory_space<vmem>>, %arg5: memref<1x64x128xbf16, #tpu.memory_space<vmem>>, %arg6: memref<1x64x64xbf16, #tpu.memory_space<vmem>>, %arg7: memref<1x64x256xbf16, #tpu.memory_space<vmem>>, %arg8: memref<1x128x64xbf16, #tpu.memory_space<vmem>>, %arg9: memref<1x64xf32, #tpu.memory_space<vmem>>, %arg10: memref<8x64xf32, #tpu.memory_space<vmem>>, %arg11: memref<8x64xf32, #tpu.memory_space<vmem>>, %arg12: memref<8x64xf32, #tpu.memory_space<vmem>>, %arg13: memref<1x8x8xf32, #tpu.memory_space<vmem>>) attributes {dimension_semantics = [#tpu.dimension_semantics<arbitrary>], iteration_bounds = array<i64: 2>, scalar_prefetch = 0 : i64, scratch_operands = 3 : i64, tpu.core_type = #tpu.core_type<tc>, window_params = [{pipeline_mode = #tpu.pipeline_mode<synchronous>, transform_indices = @transform_0, window_bounds = array<i64: 8, 64>}, {pipeline_mode = #tpu.pipeline_mode<synchronous>, transform_indices = @transform_1, window_bounds = array<i64: 8, 16>}, {pipeline_mode = #tpu.pipeline_mode<synchronous>, transform_indices = @transform_2, window_bounds = array<i64: 8, 16>}, {transform_indices = @transform_3, window_bounds = array<i64: 1, 14, 64>}, {transform_indices = @transform_4, window_bounds = array<i64: 1, 64, 128>}, {transform_indices = @transform_5, window_bounds = array<i64: 1, 64, 64>}, {transform_indices = @transform_6, window_bounds = array<i64: 1, 64, 256>}, {transform_indices = @transform_7, window_bounds = array<i64: 1, 128, 64>}, {pipeline_mode = #tpu.pipeline_mode<synchronous>, transform_indices = @transform_8, window_bounds = array<i64: 1, 64>}, {pipeline_mode = #tpu.pipeline_mode<synchronous>, transform_indices = @transform_9, window_bounds = array<i64: 8, 64>}]} {
    %c0_i32 = arith.constant 0 : i32
    %0 = arith.cmpi eq, %arg0, %c0_i32 : i32
    %1 = arith.extui %0 : i1 to i32
    %c0_i32_0 = arith.constant 0 : i32
    %2 = arith.cmpi ne, %1, %c0_i32_0 : i32
    scf.if %2 {
      %c0_78 = arith.constant 0 : index
      %c0_79 = arith.constant 0 : index
      %267 = vector.load %arg1[%c0_78, %c0_79] : memref<8x64xf32, #tpu.memory_space<vmem>>, vector<8x64xf32>
      %c0_80 = arith.constant 0 : index
      %c0_81 = arith.constant 0 : index
      %268 = vector.load %arg11[%c0_80, %c0_81] : memref<8x64xf32, #tpu.memory_space<vmem>>, vector<8x64xf32>
      tpu.vector_store %arg11[%c0_80, %c0_81], %267 {strides = array<i32>} : memref<8x64xf32, #tpu.memory_space<vmem>>, vector<8x64xf32>,
      %cst_82 = arith.constant 0.000000e+00 : f32
      %269 = vector.broadcast %cst_82 : f32 to vector<8x64xf32>
      %c0_83 = arith.constant 0 : index
      %c0_84 = arith.constant 0 : index
      %270 = vector.load %arg12[%c0_83, %c0_84] : memref<8x64xf32, #tpu.memory_space<vmem>>, vector<8x64xf32>
      tpu.vector_store %arg12[%c0_83, %c0_84], %269 {strides = array<i32>} : memref<8x64xf32, #tpu.memory_space<vmem>>, vector<8x64xf32>,
      %271 = tpu.iota {dimensions = array<i32: 0>} : vector<8x8xi32>
      %272 = tpu.iota {dimensions = array<i32: 1>} : vector<8x8xi32>
      %273 = arith.cmpi sle, %272, %271 : vector<8x8xi32>
      %274 = arith.extui %273 : vector<8x8xi1> to vector<8x8xi32>
      %275 = arith.sitofp %274 : vector<8x8xi32> to vector<8x8xf32>
      %276 = vector.shape_cast %275 : vector<8x8xf32> to vector<1x8x8xf32>
      %c0_85 = arith.constant 0 : index
      %c0_86 = arith.constant 0 : index
      %c0_87 = arith.constant 0 : index
      %277 = vector.load %arg13[%c0_85, %c0_86, %c0_87] : memref<1x8x8xf32, #tpu.memory_space<vmem>>, vector<1x8x8xf32>
      tpu.vector_store %arg13[%c0_85, %c0_86, %c0_87], %276 {strides = array<i32>} : memref<1x8x8xf32, #tpu.memory_space<vmem>>, vector<1x8x8xf32>,
    } else {
    }
    %c0 = arith.constant 0 : index
    %c0_1 = arith.constant 0 : index
    %c0_2 = arith.constant 0 : index
    %3 = vector.load %arg4[%c0, %c0_1, %c0_2] : memref<1x14x64xf32, #tpu.memory_space<vmem>>, vector<1x14x64xf32>
    %4 = vector.shape_cast %3 : vector<1x14x64xf32> to vector<14x64xf32>
    %5 = vector.extract_strided_slice %4 {offsets = [0, 0], sizes = [1, 64], strides = [1, 1]} : vector<14x64xf32> to vector<1x64xf32>
    %6 = vector.extract_strided_slice %4 {offsets = [1, 0], sizes = [1, 64], strides = [1, 1]} : vector<14x64xf32> to vector<1x64xf32>
    %7 = vector.extract_strided_slice %4 {offsets = [2, 0], sizes = [4, 16], strides = [1, 1]} : vector<14x64xf32> to vector<4x16xf32>
    %8 = vector.extract_strided_slice %4 {offsets = [6, 0], sizes = [4, 16], strides = [1, 1]} : vector<14x64xf32> to vector<4x16xf32>
    %9 = vector.extract_strided_slice %4 {offsets = [10, 0], sizes = [2, 16], strides = [1, 1]} : vector<14x64xf32> to vector<2x16xf32>
    %10 = vector.extract_strided_slice %4 {offsets = [12, 0], sizes = [2, 16], strides = [1, 1]} : vector<14x64xf32> to vector<2x16xf32>
    %c0_3 = arith.constant 0 : index
    %c0_4 = arith.constant 0 : index
    %11 = vector.load %arg2[%c0_3, %c0_4] : memref<8x16xf32, #tpu.memory_space<vmem>>, vector<8x16xf32>
    %c0_5 = arith.constant 0 : index
    %c0_6 = arith.constant 0 : index
    %12 = vector.load %arg3[%c0_5, %c0_6] : memref<8x16xf32, #tpu.memory_space<vmem>>, vector<8x16xf32>
    %c0_7 = arith.constant 0 : index
    %c0_8 = arith.constant 0 : index
    %13 = vector.load %arg11[%c0_7, %c0_8] : memref<8x64xf32, #tpu.memory_space<vmem>>, vector<8x64xf32>
    %c0_9 = arith.constant 0 : index
    %c0_10 = arith.constant 0 : index
    %14 = vector.load %arg12[%c0_9, %c0_10] : memref<8x64xf32, #tpu.memory_space<vmem>>, vector<8x64xf32>
    %15 = arith.addf %13, %14 : vector<8x64xf32>
    %16 = arith.mulf %15, %15 : vector<8x64xf32>
    %cst = arith.constant dense<0.000000e+00> : vector<8xf32>
    %17 = vector.multi_reduction <add>, %16, %cst [1] : vector<8x64xf32> to vector<8xf32>
    %18 = vector.shape_cast %17 : vector<8xf32> to vector<8x1xf32>
    %cst_11 = arith.constant 6.400000e+01 : f32
    %19 = vector.broadcast %cst_11 : f32 to vector<8x1xf32>
    %20 = arith.divf %18, %19 : vector<8x1xf32>
    %cst_12 = arith.constant 9.99999997E-7 : f32
    %21 = vector.broadcast %cst_12 : f32 to vector<8x1xf32>
    %22 = arith.addf %20, %21 : vector<8x1xf32>
    %23 = math.rsqrt %22 : vector<8x1xf32>
    %24 = vector.broadcast %23 : vector<8x1xf32> to vector<8x64xf32>
    %25 = arith.mulf %15, %24 : vector<8x64xf32>
    %26 = vector.broadcast %5 : vector<1x64xf32> to vector<8x64xf32>
    %27 = arith.mulf %25, %26 : vector<8x64xf32>
    %28 = arith.truncf %27 : vector<8x64xf32> to vector<8x64xbf16>
    %c0_13 = arith.constant 0 : index
    %c0_14 = arith.constant 0 : index
    %c0_15 = arith.constant 0 : index
    %29 = vector.load %arg5[%c0_13, %c0_14, %c0_15] : memref<1x64x128xbf16, #tpu.memory_space<vmem>>, vector<1x64x128xbf16>
    %30 = vector.shape_cast %29 : vector<1x64x128xbf16> to vector<64x128xbf16>
    %cst_16 = arith.constant dense<0.000000e+00> : vector<8x128xf32>
    %31 = tpu.matmul %28, %30, %cst_16 {dimension_numbers = #tpu.dot_dimension_numbers<[1], [0], [0], [1], [0, 0, 1, 1], [], []>} : vector<8x64xbf16>, vector<64x128xbf16>, vector<8x128xf32> -> vector<8x128xf32>
    %32 = vector.extract_strided_slice %31 {offsets = [0, 0], sizes = [8, 16], strides = [1, 1]} : vector<8x128xf32> to vector<8x16xf32>
    %33 = vector.extract_strided_slice %31 {offsets = [0, 16], sizes = [8, 16], strides = [1, 1]} : vector<8x128xf32> to vector<8x16xf32>
    %34 = vector.extract_strided_slice %31 {offsets = [0, 32], sizes = [8, 16], strides = [1, 1]} : vector<8x128xf32> to vector<8x16xf32>
    %35 = vector.extract_strided_slice %31 {offsets = [0, 48], sizes = [8, 16], strides = [1, 1]} : vector<8x128xf32> to vector<8x16xf32>
    %36 = vector.extract_strided_slice %31 {offsets = [0, 64], sizes = [8, 16], strides = [1, 1]} : vector<8x128xf32> to vector<8x16xf32>
    %37 = vector.extract_strided_slice %31 {offsets = [0, 80], sizes = [8, 16], strides = [1, 1]} : vector<8x128xf32> to vector<8x16xf32>
    %38 = vector.extract_strided_slice %31 {offsets = [0, 96], sizes = [8, 16], strides = [1, 1]} : vector<8x128xf32> to vector<8x16xf32>
    %39 = vector.extract_strided_slice %31 {offsets = [0, 112], sizes = [8, 16], strides = [1, 1]} : vector<8x128xf32> to vector<8x16xf32>
    %cst_17 = arith.constant dense<0.000000e+00> : vector<8xf32>
    %40 = vector.multi_reduction <add>, %32, %cst_17 [1] : vector<8x16xf32> to vector<8xf32>
    %41 = vector.shape_cast %40 : vector<8xf32> to vector<8x1xf32>
    %cst_18 = arith.constant 1.600000e+01 : f32
    %42 = vector.broadcast %cst_18 : f32 to vector<8x1xf32>
    %43 = arith.divf %41, %42 : vector<8x1xf32>
    %44 = vector.broadcast %43 : vector<8x1xf32> to vector<8x16xf32>
    %45 = arith.subf %32, %44 : vector<8x16xf32>
    %46 = arith.mulf %45, %45 : vector<8x16xf32>
    %cst_19 = arith.constant dense<0.000000e+00> : vector<8xf32>
    %47 = vector.multi_reduction <add>, %46, %cst_19 [1] : vector<8x16xf32> to vector<8xf32>
    %48 = vector.shape_cast %47 : vector<8xf32> to vector<8x1xf32>
    %cst_20 = arith.constant 1.600000e+01 : f32
    %49 = vector.broadcast %cst_20 : f32 to vector<8x1xf32>
    %50 = arith.divf %48, %49 : vector<8x1xf32>
    %cst_21 = arith.constant 9.99999974E-6 : f32
    %51 = vector.broadcast %cst_21 : f32 to vector<8x1xf32>
    %52 = arith.addf %50, %51 : vector<8x1xf32>
    %53 = math.rsqrt %52 : vector<8x1xf32>
    %54 = vector.broadcast %53 : vector<8x1xf32> to vector<8x16xf32>
    %55 = arith.mulf %45, %54 : vector<8x16xf32>
    %cst_22 = arith.constant dense<0.000000e+00> : vector<8xf32>
    %56 = vector.multi_reduction <add>, %33, %cst_22 [1] : vector<8x16xf32> to vector<8xf32>
    %57 = vector.shape_cast %56 : vector<8xf32> to vector<8x1xf32>
    %cst_23 = arith.constant 1.600000e+01 : f32
    %58 = vector.broadcast %cst_23 : f32 to vector<8x1xf32>
    %59 = arith.divf %57, %58 : vector<8x1xf32>
    %60 = vector.broadcast %59 : vector<8x1xf32> to vector<8x16xf32>
    %61 = arith.subf %33, %60 : vector<8x16xf32>
    %62 = arith.mulf %61, %61 : vector<8x16xf32>
    %cst_24 = arith.constant dense<0.000000e+00> : vector<8xf32>
    %63 = vector.multi_reduction <add>, %62, %cst_24 [1] : vector<8x16xf32> to vector<8xf32>
    %64 = vector.shape_cast %63 : vector<8xf32> to vector<8x1xf32>
    %cst_25 = arith.constant 1.600000e+01 : f32
    %65 = vector.broadcast %cst_25 : f32 to vector<8x1xf32>
    %66 = arith.divf %64, %65 : vector<8x1xf32>
    %cst_26 = arith.constant 9.99999974E-6 : f32
    %67 = vector.broadcast %cst_26 : f32 to vector<8x1xf32>
    %68 = arith.addf %66, %67 : vector<8x1xf32>
    %69 = math.rsqrt %68 : vector<8x1xf32>
    %70 = vector.broadcast %69 : vector<8x1xf32> to vector<8x16xf32>
    %71 = arith.mulf %61, %70 : vector<8x16xf32>
    %cst_27 = arith.constant dense<0.000000e+00> : vector<8xf32>
    %72 = vector.multi_reduction <add>, %34, %cst_27 [1] : vector<8x16xf32> to vector<8xf32>
    %73 = vector.shape_cast %72 : vector<8xf32> to vector<8x1xf32>
    %cst_28 = arith.constant 1.600000e+01 : f32
    %74 = vector.broadcast %cst_28 : f32 to vector<8x1xf32>
    %75 = arith.divf %73, %74 : vector<8x1xf32>
    %76 = vector.broadcast %75 : vector<8x1xf32> to vector<8x16xf32>
    %77 = arith.subf %34, %76 : vector<8x16xf32>
    %78 = arith.mulf %77, %77 : vector<8x16xf32>
    %cst_29 = arith.constant dense<0.000000e+00> : vector<8xf32>
    %79 = vector.multi_reduction <add>, %78, %cst_29 [1] : vector<8x16xf32> to vector<8xf32>
    %80 = vector.shape_cast %79 : vector<8xf32> to vector<8x1xf32>
    %cst_30 = arith.constant 1.600000e+01 : f32
    %81 = vector.broadcast %cst_30 : f32 to vector<8x1xf32>
    %82 = arith.divf %80, %81 : vector<8x1xf32>
    %cst_31 = arith.constant 9.99999974E-6 : f32
    %83 = vector.broadcast %cst_31 : f32 to vector<8x1xf32>
    %84 = arith.addf %82, %83 : vector<8x1xf32>
    %85 = math.rsqrt %84 : vector<8x1xf32>
    %86 = vector.broadcast %85 : vector<8x1xf32> to vector<8x16xf32>
    %87 = arith.mulf %77, %86 : vector<8x16xf32>
    %cst_32 = arith.constant dense<0.000000e+00> : vector<8xf32>
    %88 = vector.multi_reduction <add>, %35, %cst_32 [1] : vector<8x16xf32> to vector<8xf32>
    %89 = vector.shape_cast %88 : vector<8xf32> to vector<8x1xf32>
    %cst_33 = arith.constant 1.600000e+01 : f32
    %90 = vector.broadcast %cst_33 : f32 to vector<8x1xf32>
    %91 = arith.divf %89, %90 : vector<8x1xf32>
    %92 = vector.broadcast %91 : vector<8x1xf32> to vector<8x16xf32>
    %93 = arith.subf %35, %92 : vector<8x16xf32>
    %94 = arith.mulf %93, %93 : vector<8x16xf32>
    %cst_34 = arith.constant dense<0.000000e+00> : vector<8xf32>
    %95 = vector.multi_reduction <add>, %94, %cst_34 [1] : vector<8x16xf32> to vector<8xf32>
    %96 = vector.shape_cast %95 : vector<8xf32> to vector<8x1xf32>
    %cst_35 = arith.constant 1.600000e+01 : f32
    %97 = vector.broadcast %cst_35 : f32 to vector<8x1xf32>
    %98 = arith.divf %96, %97 : vector<8x1xf32>
    %cst_36 = arith.constant 9.99999974E-6 : f32
    %99 = vector.broadcast %cst_36 : f32 to vector<8x1xf32>
    %100 = arith.addf %98, %99 : vector<8x1xf32>
    %101 = math.rsqrt %100 : vector<8x1xf32>
    %102 = vector.broadcast %101 : vector<8x1xf32> to vector<8x16xf32>
    %103 = arith.mulf %93, %102 : vector<8x16xf32>
    %104 = vector.shape_cast %55 : vector<8x16xf32> to vector<1x8x16xf32>
    %105 = vector.shape_cast %71 : vector<8x16xf32> to vector<1x8x16xf32>
    %106 = vector.shape_cast %87 : vector<8x16xf32> to vector<1x8x16xf32>
    %107 = vector.shape_cast %103 : vector<8x16xf32> to vector<1x8x16xf32>
    %108 = tpu.concatenate %104, %105, %106, %107 in 0 : vector<1x8x16xf32>, vector<1x8x16xf32>, vector<1x8x16xf32>, vector<1x8x16xf32> -> vector<4x8x16xf32>
    %109 = vector.shape_cast %7 : vector<4x16xf32> to vector<4x1x16xf32>
    %110 = vector.broadcast %109 : vector<4x1x16xf32> to vector<4x8x16xf32>
    %111 = arith.mulf %108, %110 : vector<4x8x16xf32>
    %112 = vector.shape_cast %8 : vector<4x16xf32> to vector<4x1x16xf32>
    %113 = vector.broadcast %112 : vector<4x1x16xf32> to vector<4x8x16xf32>
    %114 = arith.addf %111, %113 : vector<4x8x16xf32>
    %115 = vector.extract_strided_slice %114 {offsets = [0, 0, 8], sizes = [4, 8, 8], strides = [1, 1, 1]} : vector<4x8x16xf32> to vector<4x8x8xf32>
    %116 = vector.extract_strided_slice %114 {offsets = [0, 0, 0], sizes = [4, 8, 8], strides = [1, 1, 1]} : vector<4x8x16xf32> to vector<4x8x8xf32>
    %117 = tpu.concatenate %115, %116 in 2 : vector<4x8x8xf32>, vector<4x8x8xf32> -> vector<4x8x16xf32>
    %118 = vector.shape_cast %11 : vector<8x16xf32> to vector<1x8x16xf32>
    %119 = vector.broadcast %118 : vector<1x8x16xf32> to vector<4x8x16xf32>
    %120 = arith.mulf %114, %119 : vector<4x8x16xf32>
    %121 = vector.shape_cast %12 : vector<8x16xf32> to vector<1x8x16xf32>
    %122 = vector.broadcast %121 : vector<1x8x16xf32> to vector<4x8x16xf32>
    %123 = arith.mulf %117, %122 : vector<4x8x16xf32>
    %124 = arith.addf %120, %123 : vector<4x8x16xf32>
    %cst_37 = arith.constant 2.500000e-01 : f32
    %125 = vector.broadcast %cst_37 : f32 to vector<4x8x16xf32>
    %126 = arith.mulf %124, %125 : vector<4x8x16xf32>
    %cst_38 = arith.constant dense<0.000000e+00> : vector<8xf32>
    %127 = vector.multi_reduction <add>, %36, %cst_38 [1] : vector<8x16xf32> to vector<8xf32>
    %128 = vector.shape_cast %127 : vector<8xf32> to vector<8x1xf32>
    %cst_39 = arith.constant 1.600000e+01 : f32
    %129 = vector.broadcast %cst_39 : f32 to vector<8x1xf32>
    %130 = arith.divf %128, %129 : vector<8x1xf32>
    %131 = vector.broadcast %130 : vector<8x1xf32> to vector<8x16xf32>
    %132 = arith.subf %36, %131 : vector<8x16xf32>
    %133 = arith.mulf %132, %132 : vector<8x16xf32>
    %cst_40 = arith.constant dense<0.000000e+00> : vector<8xf32>
    %134 = vector.multi_reduction <add>, %133, %cst_40 [1] : vector<8x16xf32> to vector<8xf32>
    %135 = vector.shape_cast %134 : vector<8xf32> to vector<8x1xf32>
    %cst_41 = arith.constant 1.600000e+01 : f32
    %136 = vector.broadcast %cst_41 : f32 to vector<8x1xf32>
    %137 = arith.divf %135, %136 : vector<8x1xf32>
    %cst_42 = arith.constant 9.99999974E-6 : f32
    %138 = vector.broadcast %cst_42 : f32 to vector<8x1xf32>
    %139 = arith.addf %137, %138 : vector<8x1xf32>
    %140 = math.rsqrt %139 : vector<8x1xf32>
    %141 = vector.broadcast %140 : vector<8x1xf32> to vector<8x16xf32>
    %142 = arith.mulf %132, %141 : vector<8x16xf32>
    %cst_43 = arith.constant dense<0.000000e+00> : vector<8xf32>
    %143 = vector.multi_reduction <add>, %37, %cst_43 [1] : vector<8x16xf32> to vector<8xf32>
    %144 = vector.shape_cast %143 : vector<8xf32> to vector<8x1xf32>
    %cst_44 = arith.constant 1.600000e+01 : f32
    %145 = vector.broadcast %cst_44 : f32 to vector<8x1xf32>
    %146 = arith.divf %144, %145 : vector<8x1xf32>
    %147 = vector.broadcast %146 : vector<8x1xf32> to vector<8x16xf32>
    %148 = arith.subf %37, %147 : vector<8x16xf32>
    %149 = arith.mulf %148, %148 : vector<8x16xf32>
    %cst_45 = arith.constant dense<0.000000e+00> : vector<8xf32>
    %150 = vector.multi_reduction <add>, %149, %cst_45 [1] : vector<8x16xf32> to vector<8xf32>
    %151 = vector.shape_cast %150 : vector<8xf32> to vector<8x1xf32>
    %cst_46 = arith.constant 1.600000e+01 : f32
    %152 = vector.broadcast %cst_46 : f32 to vector<8x1xf32>
    %153 = arith.divf %151, %152 : vector<8x1xf32>
    %cst_47 = arith.constant 9.99999974E-6 : f32
    %154 = vector.broadcast %cst_47 : f32 to vector<8x1xf32>
    %155 = arith.addf %153, %154 : vector<8x1xf32>
    %156 = math.rsqrt %155 : vector<8x1xf32>
    %157 = vector.broadcast %156 : vector<8x1xf32> to vector<8x16xf32>
    %158 = arith.mulf %148, %157 : vector<8x16xf32>
    %159 = vector.shape_cast %142 : vector<8x16xf32> to vector<1x8x16xf32>
    %160 = vector.shape_cast %158 : vector<8x16xf32> to vector<1x8x16xf32>
    %161 = tpu.concatenate %159, %160 in 0 : vector<1x8x16xf32>, vector<1x8x16xf32> -> vector<2x8x16xf32>
    %162 = vector.shape_cast %9 : vector<2x16xf32> to vector<2x1x16xf32>
    %163 = vector.broadcast %162 : vector<2x1x16xf32> to vector<2x8x16xf32>
    %164 = arith.mulf %161, %163 : vector<2x8x16xf32>
    %165 = vector.shape_cast %10 : vector<2x16xf32> to vector<2x1x16xf32>
    %166 = vector.broadcast %165 : vector<2x1x16xf32> to vector<2x8x16xf32>
    %167 = arith.addf %164, %166 : vector<2x8x16xf32>
    %168 = vector.extract_strided_slice %167 {offsets = [0, 0, 8], sizes = [2, 8, 8], strides = [1, 1, 1]} : vector<2x8x16xf32> to vector<2x8x8xf32>
    %169 = vector.extract_strided_slice %167 {offsets = [0, 0, 0], sizes = [2, 8, 8], strides = [1, 1, 1]} : vector<2x8x16xf32> to vector<2x8x8xf32>
    %170 = tpu.concatenate %168, %169 in 2 : vector<2x8x8xf32>, vector<2x8x8xf32> -> vector<2x8x16xf32>
    %171 = vector.shape_cast %11 : vector<8x16xf32> to vector<1x8x16xf32>
    %172 = vector.broadcast %171 : vector<1x8x16xf32> to vector<2x8x16xf32>
    %173 = arith.mulf %167, %172 : vector<2x8x16xf32>
    %174 = vector.shape_cast %12 : vector<8x16xf32> to vector<1x8x16xf32>
    %175 = vector.broadcast %174 : vector<1x8x16xf32> to vector<2x8x16xf32>
    %176 = arith.mulf %170, %175 : vector<2x8x16xf32>
    %177 = arith.addf %173, %176 : vector<2x8x16xf32>
    %178 = vector.extract_strided_slice %177 {offsets = [0, 0, 0], sizes = [1, 8, 16], strides = [1, 1, 1]} : vector<2x8x16xf32> to vector<1x8x16xf32>
    %179 = vector.shape_cast %178 : vector<1x8x16xf32> to vector<8x16xf32>
    %180 = vector.extract_strided_slice %177 {offsets = [0, 0, 0], sizes = [1, 8, 16], strides = [1, 1, 1]} : vector<2x8x16xf32> to vector<1x8x16xf32>
    %181 = vector.shape_cast %180 : vector<1x8x16xf32> to vector<8x16xf32>
    %182 = vector.extract_strided_slice %177 {offsets = [1, 0, 0], sizes = [1, 8, 16], strides = [1, 1, 1]} : vector<2x8x16xf32> to vector<1x8x16xf32>
    %183 = vector.shape_cast %182 : vector<1x8x16xf32> to vector<8x16xf32>
    %184 = vector.extract_strided_slice %177 {offsets = [1, 0, 0], sizes = [1, 8, 16], strides = [1, 1, 1]} : vector<2x8x16xf32> to vector<1x8x16xf32>
    %185 = vector.shape_cast %184 : vector<1x8x16xf32> to vector<8x16xf32>
    %186 = vector.shape_cast %179 : vector<8x16xf32> to vector<1x8x16xf32>
    %187 = vector.shape_cast %181 : vector<8x16xf32> to vector<1x8x16xf32>
    %188 = vector.shape_cast %183 : vector<8x16xf32> to vector<1x8x16xf32>
    %189 = vector.shape_cast %185 : vector<8x16xf32> to vector<1x8x16xf32>
    %190 = tpu.concatenate %186, %187, %188, %189 in 0 : vector<1x8x16xf32>, vector<1x8x16xf32>, vector<1x8x16xf32>, vector<1x8x16xf32> -> vector<4x8x16xf32>
    %191 = vector.shape_cast %38 : vector<8x16xf32> to vector<1x8x16xf32>
    %192 = vector.shape_cast %38 : vector<8x16xf32> to vector<1x8x16xf32>
    %193 = vector.shape_cast %39 : vector<8x16xf32> to vector<1x8x16xf32>
    %194 = vector.shape_cast %39 : vector<8x16xf32> to vector<1x8x16xf32>
    %195 = tpu.concatenate %191, %192, %193, %194 in 0 : vector<1x8x16xf32>, vector<1x8x16xf32>, vector<1x8x16xf32>, vector<1x8x16xf32> -> vector<4x8x16xf32>
    %196 = arith.truncf %126 : vector<4x8x16xf32> to vector<4x8x16xbf16>
    %197 = arith.truncf %190 : vector<4x8x16xf32> to vector<4x8x16xbf16>
    "tpu.trace_start"() <{level = 10 : i32, message = "hqd,hkd->hqk"}> : () -> ()
    %cst_48 = arith.constant dense<0.000000e+00> : vector<4x8x8xf32>
    %198 = tpu.matmul %196, %197, %cst_48 {dimension_numbers = #tpu.dot_dimension_numbers<[2], [2], [1], [1], [0, 0, 0, 1, 1, 1], [0], [0]>} : vector<4x8x16xbf16>, vector<4x8x16xbf16>, vector<4x8x8xf32> -> vector<4x8x8xf32>
    "tpu.trace_stop"() : () -> ()
    %c0_49 = arith.constant 0 : index
    %c0_50 = arith.constant 0 : index
    %c0_51 = arith.constant 0 : index
    %199 = vector.load %arg13[%c0_49, %c0_50, %c0_51] : memref<1x8x8xf32, #tpu.memory_space<vmem>>, vector<1x8x8xf32>
    %cst_52 = arith.constant 0.000000e+00 : f32
    %200 = vector.broadcast %cst_52 : f32 to vector<1x8x8xf32>
    %201 = arith.cmpf ogt, %199, %200 : vector<1x8x8xf32>
    %cst_53 = arith.constant -2.38197633E+38 : f32
    %202 = vector.shape_cast %201 : vector<1x8x8xi1> to vector<1x8x8xi1>
    %203 = vector.broadcast %202 : vector<1x8x8xi1> to vector<4x8x8xi1>
    %204 = vector.broadcast %cst_53 : f32 to vector<4x8x8xf32>
    %205 = arith.select %203, %198, %204 : vector<4x8x8xi1>, vector<4x8x8xf32>
    %cst_54 = arith.constant dense<0xFF800000> : vector<4x8xf32>
    %206 = vector.multi_reduction <maximumf>, %205, %cst_54 [2] : vector<4x8x8xf32> to vector<4x8xf32>
    %207 = vector.shape_cast %206 : vector<4x8xf32> to vector<4x8x1xf32>
    %208 = vector.broadcast %207 : vector<4x8x1xf32> to vector<4x8x8xf32>
    %209 = arith.subf %205, %208 : vector<4x8x8xf32>
    %210 = math.exp %209 : vector<4x8x8xf32>
    %cst_55 = arith.constant dense<0.000000e+00> : vector<4x8xf32>
    %211 = vector.multi_reduction <add>, %210, %cst_55 [2] : vector<4x8x8xf32> to vector<4x8xf32>
    %212 = vector.shape_cast %211 : vector<4x8xf32> to vector<4x8x1xf32>
    %213 = tpu.reciprocal %212 {approx = true} : vector<4x8x1xf32> -> vector<4x8x1xf32>
    %214 = vector.broadcast %213 : vector<4x8x1xf32> to vector<4x8x8xf32>
    %215 = arith.mulf %210, %214 : vector<4x8x8xf32>
    %216 = arith.truncf %215 : vector<4x8x8xf32> to vector<4x8x8xbf16>
    %217 = arith.truncf %195 : vector<4x8x16xf32> to vector<4x8x16xbf16>
    "tpu.trace_start"() <{level = 10 : i32, message = "hqk,hkd->hqd"}> : () -> ()
    %cst_56 = arith.constant dense<0.000000e+00> : vector<4x8x16xf32>
    %218 = tpu.matmul %216, %217, %cst_56 {dimension_numbers = #tpu.dot_dimension_numbers<[2], [1], [1], [2], [0, 0, 0, 1, 1, 2], [0], [0]>} : vector<4x8x8xbf16>, vector<4x8x16xbf16>, vector<4x8x16xf32> -> vector<4x8x16xf32>
    "tpu.trace_stop"() : () -> ()
    %219 = vector.extract_strided_slice %218 {offsets = [0, 0, 0], sizes = [1, 8, 16], strides = [1, 1, 1]} : vector<4x8x16xf32> to vector<1x8x16xf32>
    %220 = vector.shape_cast %219 : vector<1x8x16xf32> to vector<8x16xf32>
    %221 = vector.extract_strided_slice %218 {offsets = [1, 0, 0], sizes = [1, 8, 16], strides = [1, 1, 1]} : vector<4x8x16xf32> to vector<1x8x16xf32>
    %222 = vector.shape_cast %221 : vector<1x8x16xf32> to vector<8x16xf32>
    %223 = vector.extract_strided_slice %218 {offsets = [2, 0, 0], sizes = [1, 8, 16], strides = [1, 1, 1]} : vector<4x8x16xf32> to vector<1x8x16xf32>
    %224 = vector.shape_cast %223 : vector<1x8x16xf32> to vector<8x16xf32>
    %225 = vector.extract_strided_slice %218 {offsets = [3, 0, 0], sizes = [1, 8, 16], strides = [1, 1, 1]} : vector<4x8x16xf32> to vector<1x8x16xf32>
    %226 = vector.shape_cast %225 : vector<1x8x16xf32> to vector<8x16xf32>
    %227 = tpu.concatenate %220, %222, %224, %226 in 1 : vector<8x16xf32>, vector<8x16xf32>, vector<8x16xf32>, vector<8x16xf32> -> vector<8x64xf32>
    %228 = arith.truncf %227 : vector<8x64xf32> to vector<8x64xbf16>
    %c0_57 = arith.constant 0 : index
    %c0_58 = arith.constant 0 : index
    %c0_59 = arith.constant 0 : index
    %229 = vector.load %arg6[%c0_57, %c0_58, %c0_59] : memref<1x64x64xbf16, #tpu.memory_space<vmem>>, vector<1x64x64xbf16>
    %230 = vector.shape_cast %229 : vector<1x64x64xbf16> to vector<64x64xbf16>
    %cst_60 = arith.constant dense<0.000000e+00> : vector<8x64xf32>
    %231 = tpu.matmul %228, %230, %cst_60 {dimension_numbers = #tpu.dot_dimension_numbers<[1], [0], [0], [1], [0, 0, 1, 1], [], []>} : vector<8x64xbf16>, vector<64x64xbf16>, vector<8x64xf32> -> vector<8x64xf32>
    %232 = arith.addf %231, %15 : vector<8x64xf32>
    %233 = arith.mulf %232, %232 : vector<8x64xf32>
    %cst_61 = arith.constant dense<0.000000e+00> : vector<8xf32>
    %234 = vector.multi_reduction <add>, %233, %cst_61 [1] : vector<8x64xf32> to vector<8xf32>
    %235 = vector.shape_cast %234 : vector<8xf32> to vector<8x1xf32>
    %cst_62 = arith.constant 6.400000e+01 : f32
    %236 = vector.broadcast %cst_62 : f32 to vector<8x1xf32>
    %237 = arith.divf %235, %236 : vector<8x1xf32>
    %cst_63 = arith.constant 9.99999997E-7 : f32
    %238 = vector.broadcast %cst_63 : f32 to vector<8x1xf32>
    %239 = arith.addf %237, %238 : vector<8x1xf32>
    %240 = math.rsqrt %239 : vector<8x1xf32>
    %241 = vector.broadcast %240 : vector<8x1xf32> to vector<8x64xf32>
    %242 = arith.mulf %232, %241 : vector<8x64xf32>
    %243 = vector.broadcast %6 : vector<1x64xf32> to vector<8x64xf32>
    %244 = arith.mulf %242, %243 : vector<8x64xf32>
    %245 = arith.truncf %244 : vector<8x64xf32> to vector<8x64xbf16>
    %c0_64 = arith.constant 0 : index
    %c0_65 = arith.constant 0 : index
    %c0_66 = arith.constant 0 : index
    %246 = vector.load %arg7[%c0_64, %c0_65, %c0_66] : memref<1x64x256xbf16, #tpu.memory_space<vmem>>, vector<1x64x256xbf16>
    %247 = vector.shape_cast %246 : vector<1x64x256xbf16> to vector<64x256xbf16>
    %cst_67 = arith.constant dense<0.000000e+00> : vector<8x256xf32>
    %248 = tpu.matmul %245, %247, %cst_67 {dimension_numbers = #tpu.dot_dimension_numbers<[1], [0], [0], [1], [0, 0, 1, 1], [], []>} : vector<8x64xbf16>, vector<64x256xbf16>, vector<8x256xf32> -> vector<8x256xf32>
    %249 = vector.extract_strided_slice %248 {offsets = [0, 0], sizes = [8, 128], strides = [1, 1]} : vector<8x256xf32> to vector<8x128xf32>
    %250 = vector.extract_strided_slice %248 {offsets = [0, 128], sizes = [8, 128], strides = [1, 1]} : vector<8x256xf32> to vector<8x128xf32>
    %251 = arith.negf %249 : vector<8x128xf32>
    %252 = math.exp %251 : vector<8x128xf32>
    %cst_68 = arith.constant 1.000000e+00 : f32
    %253 = vector.broadcast %cst_68 : f32 to vector<8x128xf32>
    %254 = arith.addf %253, %252 : vector<8x128xf32>
    %255 = arith.divf %253, %254 : vector<8x128xf32>
    %256 = arith.mulf %249, %255 : vector<8x128xf32>
    %257 = arith.mulf %256, %250 : vector<8x128xf32>
    %258 = arith.truncf %257 : vector<8x128xf32> to vector<8x128xbf16>
    %c0_69 = arith.constant 0 : index
    %c0_70 = arith.constant 0 : index
    %c0_71 = arith.constant 0 : index
    %259 = vector.load %arg8[%c0_69, %c0_70, %c0_71] : memref<1x128x64xbf16, #tpu.memory_space<vmem>>, vector<1x128x64xbf16>
    %260 = vector.shape_cast %259 : vector<1x128x64xbf16> to vector<128x64xbf16>
    %cst_72 = arith.constant dense<0.000000e+00> : vector<8x64xf32>
    %261 = tpu.matmul %258, %260, %cst_72 {dimension_numbers = #tpu.dot_dimension_numbers<[1], [0], [0], [1], [0, 0, 1, 1], [], []>} : vector<8x128xbf16>, vector<128x64xbf16>, vector<8x64xf32> -> vector<8x64xf32>
    %c0_73 = arith.constant 0 : index
    %c0_74 = arith.constant 0 : index
    %262 = vector.load %arg11[%c0_73, %c0_74] : memref<8x64xf32, #tpu.memory_space<vmem>>, vector<8x64xf32>
    tpu.vector_store %arg11[%c0_73, %c0_74], %261 {strides = array<i32>} : memref<8x64xf32, #tpu.memory_space<vmem>>, vector<8x64xf32>,
    %c0_75 = arith.constant 0 : index
    %c0_76 = arith.constant 0 : index
    %263 = vector.load %arg12[%c0_75, %c0_76] : memref<8x64xf32, #tpu.memory_space<vmem>>, vector<8x64xf32>
    tpu.vector_store %arg12[%c0_75, %c0_76], %232 {strides = array<i32>} : memref<8x64xf32, #tpu.memory_space<vmem>>, vector<8x64xf32>,
    %c1_i32 = arith.constant 1 : i32
    %264 = arith.cmpi eq, %arg0, %c1_i32 : i32
    %265 = arith.extui %264 : i1 to i32
    %c0_i32_77 = arith.constant 0 : i32
    %266 = arith.cmpi ne, %265, %c0_i32_77 : i32
    scf.if %266 {
      %267 = arith.addf %261, %232 : vector<8x64xf32>
      %c0_78 = arith.constant 0 : index
      %c0_79 = arith.constant 0 : index
      %268 = vector.load %arg9[%c0_78, %c0_79] : memref<1x64xf32, #tpu.memory_space<vmem>>, vector<1x64xf32>
      %269 = arith.mulf %267, %267 : vector<8x64xf32>
      %cst_80 = arith.constant dense<0.000000e+00> : vector<8xf32>
      %270 = vector.multi_reduction <add>, %269, %cst_80 [1] : vector<8x64xf32> to vector<8xf32>
      %271 = vector.shape_cast %270 : vector<8xf32> to vector<8x1xf32>
      %cst_81 = arith.constant 6.400000e+01 : f32
      %272 = vector.broadcast %cst_81 : f32 to vector<8x1xf32>
      %273 = arith.divf %271, %272 : vector<8x1xf32>
      %cst_82 = arith.constant 9.99999997E-7 : f32
      %274 = vector.broadcast %cst_82 : f32 to vector<8x1xf32>
      %275 = arith.addf %273, %274 : vector<8x1xf32>
      %276 = math.rsqrt %275 : vector<8x1xf32>
      %277 = vector.broadcast %276 : vector<8x1xf32> to vector<8x64xf32>
      %278 = arith.mulf %267, %277 : vector<8x64xf32>
      %279 = vector.broadcast %268 : vector<1x64xf32> to vector<8x64xf32>
      %280 = arith.mulf %278, %279 : vector<8x64xf32>
      %c0_83 = arith.constant 0 : index
      %c0_84 = arith.constant 0 : index
      %281 = vector.load %arg10[%c0_83, %c0_84] : memref<8x64xf32, #tpu.memory_space<vmem>>, vector<8x64xf32>
      tpu.vector_store %arg10[%c0_83, %c0_84], %280 {strides = array<i32>} : memref<8x64xf32, #tpu.memory_space<vmem>>, vector<8x64xf32>,
    } else {
    }
    return
  }
  func.func @transform_0(%arg0: i32) -> (i32, i32) {
    %c0_i32 = arith.constant 0 : i32
    %c0_i32_0 = arith.constant 0 : i32
    %c0_i32_1 = arith.constant 0 : i32
    return %c0_i32, %c0_i32_0 : i32, i32
  }
  func.func @transform_1(%arg0: i32) -> (i32, i32) {
    %c0_i32 = arith.constant 0 : i32
    %c0_i32_0 = arith.constant 0 : i32
    %c0_i32_1 = arith.constant 0 : i32
    return %c0_i32, %c0_i32_0 : i32, i32
  }
  func.func @transform_2(%arg0: i32) -> (i32, i32) {
    %c0_i32 = arith.constant 0 : i32
    %c0_i32_0 = arith.constant 0 : i32
    %c0_i32_1 = arith.constant 0 : i32
    return %c0_i32, %c0_i32_0 : i32, i32
  }
  func.func @transform_3(%arg0: i32) -> (i32, i32, i32) {
    %c0_i32 = arith.constant 0 : i32
    %c0_i32_0 = arith.constant 0 : i32
    %c0_i32_1 = arith.constant 0 : i32
    return %arg0, %c0_i32, %c0_i32_0 : i32, i32, i32
  }
  func.func @transform_4(%arg0: i32) -> (i32, i32, i32) {
    %c0_i32 = arith.constant 0 : i32
    %c0_i32_0 = arith.constant 0 : i32
    %c0_i32_1 = arith.constant 0 : i32
    return %arg0, %c0_i32, %c0_i32_0 : i32, i32, i32
  }
  func.func @transform_5(%arg0: i32) -> (i32, i32, i32) {
    %c0_i32 = arith.constant 0 : i32
    %c0_i32_0 = arith.constant 0 : i32
    %c0_i32_1 = arith.constant 0 : i32
    return %arg0, %c0_i32, %c0_i32_0 : i32, i32, i32
  }
  func.func @transform_6(%arg0: i32) -> (i32, i32, i32) {
    %c0_i32 = arith.constant 0 : i32
    %c0_i32_0 = arith.constant 0 : i32
    %c0_i32_1 = arith.constant 0 : i32
    return %arg0, %c0_i32, %c0_i32_0 : i32, i32, i32
  }
  func.func @transform_7(%arg0: i32) -> (i32, i32, i32) {
    %c0_i32 = arith.constant 0 : i32
    %c0_i32_0 = arith.constant 0 : i32
    %c0_i32_1 = arith.constant 0 : i32
    return %arg0, %c0_i32, %c0_i32_0 : i32, i32, i32
  }
  func.func @transform_8(%arg0: i32) -> (i32, i32) {
    %c0_i32 = arith.constant 0 : i32
    %c0_i32_0 = arith.constant 0 : i32
    %c0_i32_1 = arith.constant 0 : i32
    return %c0_i32, %c0_i32_0 : i32, i32
  }
  func.func @transform_9(%arg0: i32) -> (i32, i32) {
    %c0_i32 = arith.constant 0 : i32
    %c0_i32_0 = arith.constant 0 : i32
    %c0_i32_1 = arith.constant 0 : i32
    return %c0_i32, %c0_i32_0 : i32, i32
  }
}

</mosaic_0001>

<llo_original>
// kernel: chameleon_forward.1
$region0: #{chameleon_forward.1}
  #allocation0 [shape = 'u32[]', space=smem, size = 0x4, offset = 0x4, fixed_abs, tag = 'smem constant byte address 0x4 - core index']
  #allocation1 [shape = 'u32[72,128]{1,0:T(1,128)}', space=vmem, size = 0x9000, scoped, tag = 'internal scratch']
  #allocation2 [shape = 'f32[8,64]{1,0:T(8,128)}', space=vmem, size = 0x1000, scoped, tag = 'scratch operand']
  #allocation3 [shape = 'f32[8,64]{1,0:T(8,128)}', space=vmem, size = 0x1000, scoped, tag = 'scratch operand']
  #allocation4 [shape = 'f32[1,8,8]{2,1,0:T(8,128)}', space=vmem, size = 0x1000, scoped, tag = 'scratch operand']
  %s0 = inlined_call_operand.vmem [shape: f32[8,64], index: 0, kind: input, shape index: {}]
  %s1 = inlined_call_operand.vmem [shape: f32[8,16], index: 1, kind: input, shape index: {}]
  %s2 = inlined_call_operand.vmem [shape: f32[8,16], index: 2, kind: input, shape index: {}]
  %s3 = inlined_call_operand.vmem [shape: f32[2,14,64], index: 3, kind: input, shape index: {}]
  %s4 = inlined_call_operand.vmem [shape: bf16[2,64,128], index: 4, kind: input, shape index: {}]
  %s5 = inlined_call_operand.vmem [shape: bf16[2,64,64], index: 5, kind: input, shape index: {}]
  %s6 = inlined_call_operand.vmem [shape: bf16[2,64,256], index: 6, kind: input, shape index: {}]
  %s7 = inlined_call_operand.vmem [shape: bf16[2,128,64], index: 7, kind: input, shape index: {}]
  %s8 = inlined_call_operand.vmem [shape: f32[1,64], index: 8, kind: input, shape index: {}]
  %s9 = inlined_call_operand.hbm [shape: f32[8,64], index: 9, kind: output, shape index: {}]
  %s10 = sld [smem:[#allocation0]]
  $region77: #{chameleon_forward.1} parent=0
    _
  %s12 = ssub.s32 1, %s10
  %s13 = scalar_select 0, %s12, %s10
  $region1: #{chameleon_forward.1} parent=0
    #allocation5 [shape = 'u8[4096]{0}', space=vmem, size = 0x1000, scoped, tag = 'output window, operand 0, single buffered']
    #allocation6 [shape = 's32[2]{0}', space=sflag, size = 0x8, scoped, tag = 'scoped memory for chameleon_forward.1']
    %14 = vsyncpa [#allocation6], 0
    loop: start=0, step=1, limit=4
    $region2: #{chameleon_forward.1} parent=1 // loop_pre_header
      _
    $region3: #{chameleon_forward.1} parent=1 // loop_header
      %s16 = sphi 0, %s20
      %p17 = scmp.ge.s32.totalorder %s16, 4
      %s24 = sphi 0, %s24
      %s26 = sphi 0, %s24
      %s27 = sphi 0, %s26
      %s41 = sphi 0, %s27
      %s45 = sphi 0, %s45
      %s47 = sphi 0, %s45
      %s48 = sphi 0, %s47
      %s62 = sphi 0, %s48
      %s66 = sphi 0, %s66
      %s68 = sphi 0, %s66
      %s69 = sphi 0, %s68
      %s83 = sphi 0, %s69
      %s89 = sphi 0, %s91
      %s92 = sphi 0, %s89
      %s93 = sphi 0, %s92
      %s109 = sphi 0, %s93
      %s115 = sphi 0, %s117
      %s118 = sphi 0, %s115
      %s119 = sphi 0, %s118
      %s135 = sphi 0, %s119
      %s141 = sphi 0, %s143
      %s144 = sphi 0, %s141
      %s145 = sphi 0, %s144
      %s161 = sphi 0, %s145
      %s167 = sphi 0, %s169
      %s170 = sphi 0, %s167
      %s171 = sphi 0, %s170
      %s187 = sphi 0, %s171
      %s193 = sphi 0, %s195
      %s196 = sphi 0, %s193
      %s197 = sphi 0, %s196
      %s213 = sphi 0, %s197
      %s217 = sphi 0, %s217
      %s219 = sphi 0, %s217
      %s220 = sphi 0, %s219
      %s234 = sphi 0, %s220
      %s238 = sphi 0, %s238
      %s240 = sphi 0, %s238
      %s241 = sphi 0, %s240
      %s255 = sphi 0, %s241
    $region4: #{chameleon_forward.1} parent=1 // loop_header_branch
      %19 = sbr.rel (%p17) target = $region8
    $region5: #{chameleon_forward.1} parent=1 // loop_body
      %s21 = ssub.s32 %s16, 1
      %s22 = ssub.s32 %s16, 2
      %s23 = sadd.s32 %s16, 1
      %s25 = sadd.s32 %s24, 1
      %p28 = scmp.eq.s32.totalorder %s16, 1
      %p29 = scmp.ne.s32.totalorder %s24, %s26
      %p30 = scmp.eq.s32.totalorder %s16, 0
      %p31 = por %p29, %p30
      %p32 = scmp.ne.s32.totalorder %s24, %s26
      %p33 = scmp.eq.s32.totalorder %s21, 1
      %p34 = por %p32, %p33
      %p35 = scmp.ne.s32.totalorder %s26, %s27
      %p36 = scmp.eq.s32.totalorder %s21, 0
      %p37 = por %p35, %p36
      %p38 = scmp.ne.s32.totalorder %s26, %s27
      %p39 = scmp.eq.s32.totalorder %s22, 1
      %p40 = por %p38, %p39
      %p42 = scmp.ne.s32.totalorder %s27, %s41
      %p43 = scmp.eq.s32.totalorder %s22, 0
      %p44 = por %p42, %p43
      %s46 = sadd.s32 %s45, 1
      %p49 = scmp.eq.s32.totalorder %s16, 1
      %p50 = scmp.ne.s32.totalorder %s45, %s47
      %p51 = scmp.eq.s32.totalorder %s16, 0
      %p52 = por %p50, %p51
      %p53 = scmp.ne.s32.totalorder %s45, %s47
      %p54 = scmp.eq.s32.totalorder %s21, 1
      %p55 = por %p53, %p54
      %p56 = scmp.ne.s32.totalorder %s47, %s48
      %p57 = scmp.eq.s32.totalorder %s21, 0
      %p58 = por %p56, %p57
      %p59 = scmp.ne.s32.totalorder %s47, %s48
      %p60 = scmp.eq.s32.totalorder %s22, 1
      %p61 = por %p59, %p60
      %p63 = scmp.ne.s32.totalorder %s48, %s62
      %p64 = scmp.eq.s32.totalorder %s22, 0
      %p65 = por %p63, %p64
      %s67 = sadd.s32 %s66, 1
      %p70 = scmp.eq.s32.totalorder %s16, 1
      %p71 = scmp.ne.s32.totalorder %s66, %s68
      %p72 = scmp.eq.s32.totalorder %s16, 0
      %p73 = por %p71, %p72
      %p74 = scmp.ne.s32.totalorder %s66, %s68
      %p75 = scmp.eq.s32.totalorder %s21, 1
      %p76 = por %p74, %p75
      %p77 = scmp.ne.s32.totalorder %s68, %s69
      %p78 = scmp.eq.s32.totalorder %s21, 0
      %p79 = por %p77, %p78
      %p80 = scmp.ne.s32.totalorder %s68, %s69
      %p81 = scmp.eq.s32.totalorder %s22, 1
      %p82 = por %p80, %p81
      %p84 = scmp.ne.s32.totalorder %s69, %s83
      %p85 = scmp.eq.s32.totalorder %s22, 0
      %p86 = por %p84, %p85
      %s87 = ssub.s32 %s16, %s23
      %p88 = scmp.eq.s32.totalorder %s87, 0
      %s90 = sadd.s32 %s89, 1
      %s91 = scalar_select %p88, %s89, %s90
      %p94 = pneg %p88
      %p95 = scmp.eq.s32.totalorder %s16, 1
      %p96 = por %p94, %p95
      %p97 = scmp.ne.s32.totalorder %s89, %s92
      %p98 = scmp.eq.s32.totalorder %s16, 0
      %p99 = por %p97, %p98
      %p100 = scmp.ne.s32.totalorder %s89, %s92
      %p101 = scmp.eq.s32.totalorder %s21, 1
      %p102 = por %p100, %p101
      %p103 = scmp.ne.s32.totalorder %s92, %s93
      %p104 = scmp.eq.s32.totalorder %s21, 0
      %p105 = por %p103, %p104
      %p106 = scmp.ne.s32.totalorder %s92, %s93
      %p107 = scmp.eq.s32.totalorder %s22, 1
      %p108 = por %p106, %p107
      %p110 = scmp.ne.s32.totalorder %s93, %s109
      %p111 = scmp.eq.s32.totalorder %s22, 0
      %p112 = por %p110, %p111
      %s113 = ssub.s32 %s16, %s23
      %p114 = scmp.eq.s32.totalorder %s113, 0
      %s116 = sadd.s32 %s115, 1
      %s117 = scalar_select %p114, %s115, %s116
      %p120 = pneg %p114
      %p121 = scmp.eq.s32.totalorder %s16, 1
      %p122 = por %p120, %p121
      %p123 = scmp.ne.s32.totalorder %s115, %s118
      %p124 = scmp.eq.s32.totalorder %s16, 0
      %p125 = por %p123, %p124
      %p126 = scmp.ne.s32.totalorder %s115, %s118
      %p127 = scmp.eq.s32.totalorder %s21, 1
      %p128 = por %p126, %p127
      %p129 = scmp.ne.s32.totalorder %s118, %s119
      %p130 = scmp.eq.s32.totalorder %s21, 0
      %p131 = por %p129, %p130
      %p132 = scmp.ne.s32.totalorder %s118, %s119
      %p133 = scmp.eq.s32.totalorder %s22, 1
      %p134 = por %p132, %p133
      %p136 = scmp.ne.s32.totalorder %s119, %s135
      %p137 = scmp.eq.s32.totalorder %s22, 0
      %p138 = por %p136, %p137
      %s139 = ssub.s32 %s16, %s23
      %p140 = scmp.eq.s32.totalorder %s139, 0
      %s142 = sadd.s32 %s141, 1
      %s143 = scalar_select %p140, %s141, %s142
      %p146 = pneg %p140
      %p147 = scmp.eq.s32.totalorder %s16, 1
      %p148 = por %p146, %p147
      %p149 = scmp.ne.s32.totalorder %s141, %s144
      %p150 = scmp.eq.s32.totalorder %s16, 0
      %p151 = por %p149, %p150
      %p152 = scmp.ne.s32.totalorder %s141, %s144
      %p153 = scmp.eq.s32.totalorder %s21, 1
      %p154 = por %p152, %p153
      %p155 = scmp.ne.s32.totalorder %s144, %s145
      %p156 = scmp.eq.s32.totalorder %s21, 0
      %p157 = por %p155, %p156
      %p158 = scmp.ne.s32.totalorder %s144, %s145
      %p159 = scmp.eq.s32.totalorder %s22, 1
      %p160 = por %p158, %p159
      %p162 = scmp.ne.s32.totalorder %s145, %s161
      %p163 = scmp.eq.s32.totalorder %s22, 0
      %p164 = por %p162, %p163
      %s165 = ssub.s32 %s16, %s23
      %p166 = scmp.eq.s32.totalorder %s165, 0
      %s168 = sadd.s32 %s167, 1
      %s169 = scalar_select %p166, %s167, %s168
      %p172 = pneg %p166
      %p173 = scmp.eq.s32.totalorder %s16, 1
      %p174 = por %p172, %p173
      %p175 = scmp.ne.s32.totalorder %s167, %s170
      %p176 = scmp.eq.s32.totalorder %s16, 0
      %p177 = por %p175, %p176
      %p178 = scmp.ne.s32.totalorder %s167, %s170
      %p179 = scmp.eq.s32.totalorder %s21, 1
      %p180 = por %p178, %p179
      %p181 = scmp.ne.s32.totalorder %s170, %s171
      %p182 = scmp.eq.s32.totalorder %s21, 0
      %p183 = por %p181, %p182
      %p184 = scmp.ne.s32.totalorder %s170, %s171
      %p185 = scmp.eq.s32.totalorder %s22, 1
      %p186 = por %p184, %p185
      %p188 = scmp.ne.s32.totalorder %s171, %s187
      %p189 = scmp.eq.s32.totalorder %s22, 0
      %p190 = por %p188, %p189
      %s191 = ssub.s32 %s16, %s23
      %p192 = scmp.eq.s32.totalorder %s191, 0
      %s194 = sadd.s32 %s193, 1
      %s195 = scalar_select %p192, %s193, %s194
      %p198 = pneg %p192
      %p199 = scmp.eq.s32.totalorder %s16, 1
      %p200 = por %p198, %p199
      %p201 = scmp.ne.s32.totalorder %s193, %s196
      %p202 = scmp.eq.s32.totalorder %s16, 0
      %p203 = por %p201, %p202
      %p204 = scmp.ne.s32.totalorder %s193, %s196
      %p205 = scmp.eq.s32.totalorder %s21, 1
      %p206 = por %p204, %p205
      %p207 = scmp.ne.s32.totalorder %s196, %s197
      %p208 = scmp.eq.s32.totalorder %s21, 0
      %p209 = por %p207, %p208
      %p210 = scmp.ne.s32.totalorder %s196, %s197
      %p211 = scmp.eq.s32.totalorder %s22, 1
      %p212 = por %p210, %p211
      %p214 = scmp.ne.s32.totalorder %s197, %s213
      %p215 = scmp.eq.s32.totalorder %s22, 0
      %p216 = por %p214, %p215
      %s218 = sadd.s32 %s217, 1
      %p221 = scmp.eq.s32.totalorder %s16, 1
      %p222 = scmp.ne.s32.totalorder %s217, %s219
      %p223 = scmp.eq.s32.totalorder %s16, 0
      %p224 = por %p222, %p223
      %p225 = scmp.ne.s32.totalorder %s217, %s219
      %p226 = scmp.eq.s32.totalorder %s21, 1
      %p227 = por %p225, %p226
      %p228 = scmp.ne.s32.totalorder %s219, %s220
      %p229 = scmp.eq.s32.totalorder %s21, 0
      %p230 = por %p228, %p229
      %p231 = scmp.ne.s32.totalorder %s219, %s220
      %p232 = scmp.eq.s32.totalorder %s22, 1
      %p233 = por %p231, %p232
      %p235 = scmp.ne.s32.totalorder %s220, %s234
      %p236 = scmp.eq.s32.totalorder %s22, 0
      %p237 = por %p235, %p236
      %s239 = sadd.s32 %s238, 1
      %p242 = scmp.eq.s32.totalorder %s16, 1
      %p243 = scmp.ne.s32.totalorder %s238, %s240
      %p244 = scmp.eq.s32.totalorder %s16, 0
      %p245 = por %p243, %p244
      %p246 = scmp.ne.s32.totalorder %s238, %s240
      %p247 = scmp.eq.s32.totalorder %s21, 1
      %p248 = por %p246, %p247
      %p249 = scmp.ne.s32.totalorder %s240, %s241
      %p250 = scmp.eq.s32.totalorder %s21, 0
      %p251 = por %p249, %p250
      %p252 = scmp.ne.s32.totalorder %s240, %s241
      %p253 = scmp.eq.s32.totalorder %s22, 1
      %p254 = por %p252, %p253
      %p256 = scmp.ne.s32.totalorder %s241, %s255
      %p257 = scmp.eq.s32.totalorder %s22, 0
      %p258 = por %p256, %p257
      %p259 = scmp.le.s32.totalorder 1, %s16
      %p260 = scmp.lt.s32.totalorder %s16, 3
      %p261 = pnand %p259, %p260
      %p262 = pneg %p261
      // Predicated region
      $region9: #{chameleon_forward.1} parent=5 // pred_check
        _
      $region10: #{chameleon_forward.1} parent=5 // pred_check_branch
        %264 = sbr.rel (%p261) target = $region12
      $region11: #{chameleon_forward.1} parent=5 // pred_region
        %s265 = ssub.s32 %s16, 1
        // Predicated region
        $region13: #{chameleon_forward.1} parent=11 // pred_check
          %p266 = pneg %p37
        $region14: #{chameleon_forward.1} parent=11 // pred_check_branch
          %268 = sbr.rel (%p266) target = $region16
        $region15: #{chameleon_forward.1} parent=11 // pred_region
          _
        $region16: #{chameleon_forward.1} parent=11 // pred_fallthru
          _
        // Predicated region
        $region17: #{chameleon_forward.1} parent=11 // pred_check
          %p269 = pneg %p58
        $region18: #{chameleon_forward.1} parent=11 // pred_check_branch
          %271 = sbr.rel (%p269) target = $region20
        $region19: #{chameleon_forward.1} parent=11 // pred_region
          _
        $region20: #{chameleon_forward.1} parent=11 // pred_fallthru
          _
        // Predicated region
        $region21: #{chameleon_forward.1} parent=11 // pred_check
          %p272 = pneg %p79
        $region22: #{chameleon_forward.1} parent=11 // pred_check_branch
          %274 = sbr.rel (%p272) target = $region24
        $region23: #{chameleon_forward.1} parent=11 // pred_region
          _
        $region24: #{chameleon_forward.1} parent=11 // pred_fallthru
          _
        // Predicated region
        $region25: #{chameleon_forward.1} parent=11 // pred_check
          %p275 = pneg %p230
        $region26: #{chameleon_forward.1} parent=11 // pred_check_branch
          %277 = sbr.rel (%p275) target = $region28
        $region27: #{chameleon_forward.1} parent=11 // pred_region
          _
        $region28: #{chameleon_forward.1} parent=11 // pred_fallthru
          _
      $region12: #{chameleon_forward.1} parent=5 // pred_fallthru
        _
      %p278 = scmp.lt.s32.totalorder %s16, 2
      // Predicated region
      $region29: #{chameleon_forward.1} parent=5 // pred_check
        %p279 = pneg %p278
      $region30: #{chameleon_forward.1} parent=5 // pred_check_branch
        %281 = sbr.rel (%p279) target = $region32
      $region31: #{chameleon_forward.1} parent=5 // pred_region
        // Predicated region
        $region33: #{chameleon_forward.1} parent=31 // pred_check
          %p282 = pneg %p99
        $region34: #{chameleon_forward.1} parent=31 // pred_check_branch
          %284 = sbr.rel (%p282) target = $region36
        $region35: #{chameleon_forward.1} parent=31 // pred_region
          %p285 = scmp.lt.s32.totalorder %s16, 1
          %s286 = scalar_select %p285, %s16, 1
          %s287 = smul.addr %s286, 2
          %s288 = smul.addr %s287, 8
          %s289 = scalar_lea.vmem %s3, %s288
        $region36: #{chameleon_forward.1} parent=31 // pred_fallthru
          _
        // Predicated region
        $region37: #{chameleon_forward.1} parent=31 // pred_check
          %p290 = pneg %p125
        $region38: #{chameleon_forward.1} parent=31 // pred_check_branch
          %292 = sbr.rel (%p290) target = $region40
        $region39: #{chameleon_forward.1} parent=31 // pred_region
          %p293 = scmp.lt.s32.totalorder %s16, 1
          %s294 = scalar_select %p293, %s16, 1
          %s295 = smul.addr %s294, 8
          %s296 = smul.addr %s295, 4
          %s297 = scalar_lea.vmem %s4, %s296
        $region40: #{chameleon_forward.1} parent=31 // pred_fallthru
          _
        // Predicated region
        $region41: #{chameleon_forward.1} parent=31 // pred_check
          %p298 = pneg %p151
        $region42: #{chameleon_forward.1} parent=31 // pred_check_branch
          %300 = sbr.rel (%p298) target = $region44
        $region43: #{chameleon_forward.1} parent=31 // pred_region
          %p301 = scmp.lt.s32.totalorder %s16, 1
          %s302 = scalar_select %p301, %s16, 1
          %s303 = smul.addr %s302, 8
          %s304 = smul.addr %s303, 4
          %s305 = scalar_lea.vmem %s5, %s304
        $region44: #{chameleon_forward.1} parent=31 // pred_fallthru
          _
        // Predicated region
        $region45: #{chameleon_forward.1} parent=31 // pred_check
          %p306 = pneg %p177
        $region46: #{chameleon_forward.1} parent=31 // pred_check_branch
          %308 = sbr.rel (%p306) target = $region48
        $region47: #{chameleon_forward.1} parent=31 // pred_region
          %p309 = scmp.lt.s32.totalorder %s16, 1
          %s310 = scalar_select %p309, %s16, 1
          %s311 = smul.addr %s310, 16
          %s312 = smul.addr %s311, 4
          %s313 = scalar_lea.vmem %s6, %s312
        $region48: #{chameleon_forward.1} parent=31 // pred_fallthru
          _
        // Predicated region
        $region49: #{chameleon_forward.1} parent=31 // pred_check
          %p314 = pneg %p203
        $region50: #{chameleon_forward.1} parent=31 // pred_check_branch
          %316 = sbr.rel (%p314) target = $region52
        $region51: #{chameleon_forward.1} parent=31 // pred_region
          %p317 = scmp.lt.s32.totalorder %s16, 1
          %s318 = scalar_select %p317, %s16, 1
          %s319 = smul.addr %s318, 16
          %s320 = smul.addr %s319, 4
          %s321 = scalar_lea.vmem %s7, %s320
        $region52: #{chameleon_forward.1} parent=31 // pred_fallthru
          _
      $region32: #{chameleon_forward.1} parent=5 // pred_fallthru
        _
      %p322 = scmp.le.s32.totalorder 1, %s16
      %p323 = scmp.lt.s32.totalorder %s16, 3
      %p324 = pnand %p322, %p323
      %p325 = pneg %p324
      // Predicated region
      $region53: #{chameleon_forward.1} parent=5 // pred_check
        _
      $region54: #{chameleon_forward.1} parent=5 // pred_check_branch
        %327 = sbr.rel (%p324) target = $region56
      $region55: #{chameleon_forward.1} parent=5 // pred_region
        %s328 = ssub.s32 %s16, 1
        %p329 = pneg %p37
        %p330 = pneg %p34
        %p331 = pneg %p58
        %p332 = pneg %p55
        %p333 = pneg %p79
        %p334 = pneg %p76
        %p335 = scmp.lt.s32.totalorder %s21, 1
        %s336 = scalar_select %p335, %s21, 1
        %s337 = smul.addr %s336, 2
        %s338 = smul.addr %s337, 8
        %s339 = scalar_lea.vmem %s3, %s338
        %p340 = pneg %p105
        %p341 = pneg %p102
        %p342 = scmp.lt.s32.totalorder %s21, 1
        %s343 = scalar_select %p342, %s21, 1
        %s344 = smul.addr %s343, 8
        %s345 = smul.addr %s344, 4
        %s346 = scalar_lea.vmem %s4, %s345
        %p347 = pneg %p131
        %p348 = pneg %p128
        %p349 = scmp.lt.s32.totalorder %s21, 1
        %s350 = scalar_select %p349, %s21, 1
        %s351 = smul.addr %s350, 8
        %s352 = smul.addr %s351, 4
        %s353 = scalar_lea.vmem %s5, %s352
        %p354 = pneg %p157
        %p355 = pneg %p154
        %p356 = scmp.lt.s32.totalorder %s21, 1
        %s357 = scalar_select %p356, %s21, 1
        %s358 = smul.addr %s357, 16
        %s359 = smul.addr %s358, 4
        %s360 = scalar_lea.vmem %s6, %s359
        %p361 = pneg %p183
        %p362 = pneg %p180
        %p363 = scmp.lt.s32.totalorder %s21, 1
        %s364 = scalar_select %p363, %s21, 1
        %s365 = smul.addr %s364, 16
        %s366 = smul.addr %s365, 4
        %s367 = scalar_lea.vmem %s7, %s366
        %p368 = pneg %p209
        %p369 = pneg %p206
        %p370 = pneg %p230
        %p371 = pneg %p227
        %p372 = pneg %p251
        %p373 = pneg %p248
        %p374 = scmp.lt.s32.totalorder %s21, 1
        %s375 = scalar_select %p374, %s21, 1
        %s376 = smul.addr %s375, 2
        %s377 = smul.addr %s376, 8
        %s378 = scalar_lea.vmem %s3, %s377
        %p379 = scmp.lt.s32.totalorder %s21, 1
        %s380 = scalar_select %p379, %s21, 1
        %s381 = smul.addr %s380, 8
        %s382 = smul.addr %s381, 4
        %s383 = scalar_lea.vmem %s4, %s382
        %p384 = scmp.lt.s32.totalorder %s21, 1
        %s385 = scalar_select %p384, %s21, 1
        %s386 = smul.addr %s385, 8
        %s387 = smul.addr %s386, 4
        %s388 = scalar_lea.vmem %s5, %s387
        %p389 = scmp.lt.s32.totalorder %s21, 1
        %s390 = scalar_select %p389, %s21, 1
        %s391 = smul.addr %s390, 16
        %s392 = smul.addr %s391, 4
        %s393 = scalar_lea.vmem %s6, %s392
        %p394 = scmp.lt.s32.totalorder %s21, 1
        %s395 = scalar_select %p394, %s21, 1
        %s396 = smul.addr %s395, 16
        %s397 = smul.addr %s396, 4
        %s398 = scalar_lea.vmem %s7, %s397
        %p400 = scmp.eq.s32.totalorder %s21, 0
        // Predicated region
        $region57: #{chameleon_forward.1} parent=55 // pred_check
          %p401 = pneg %p400
        $region58: #{chameleon_forward.1} parent=55 // pred_check_branch
          %403 = sbr.rel (%p401) target = $region60
        $region59: #{chameleon_forward.1} parent=55 // pred_region
          %v404 = vld [vmem:[%s0] sm:$0xff]
          %vm405 = vcmask 523264
          %406 = vst.msk [vmem:[#allocation2] sm:$0xff] %vm405, %v404
          %407 = vst.msk [vmem:[#allocation3] sm:$0xff] %vm405, 0.0
          %v408 = vlaneseq
          %v409 = vshrl.u32 %v408, 7
          %v410 = vlaneseq
          %v411 = vand.u32 %v410, 127
          %vm412 = vcmp.le.s32.totalorder %v411, %v409
          %v413 = vsel %vm412, 1, 0
          %v414 = vcvt.s32.f32 %v413
          %vm415 = vcmask 64512
          %416 = vst.msk [vmem:[#allocation4] sm:$0xff] %vm415, %v414
        $region60: #{chameleon_forward.1} parent=55 // pred_fallthru
          _
        %v417 = vld [vmem:[%s378] sm:$0xff]
        %v418 = vld [vmem:[%s378 + $0x8] sm:$0x3f]
        %v419 = vld [vmem:[%s1] sm:$0xff]
        %v420 = vld [vmem:[%s2] sm:$0xff]
        %v421 = vld [vmem:[#allocation2] sm:$0xff]
        %v422 = vld [vmem:[#allocation3] sm:$0xff]
        %v423 = vadd.f32 %v421, %v422
        %v424 = vmul.f32 %v423, %v423
        %vm425 = vcmask 523264
        %v426 = vsel %vm425, %v424, 0.0
        %427 = vadd.xlane.f32.xlu0 %v426
        %v428 = vpop.xlane.xlu0 %427
        %v429 = vrcp.pop 64.0
        %v430 = vmul.f32 64.0, %v429
        %v431 = vsub.f32 1.0, %v430
        %v432 = vmul.f32 %v429, %v431
        %v433 = vadd.f32 %v429, %v432
        %vm434 = vweird.f32 %v429
        %v435 = vsel %vm434, %v429, %v433
        %v436 = vmul.f32 %v428, %v435
        %v437 = vadd.f32 %v436, 1e-06
        %v438 = vrsqrt.pop %v437
        %v439 = vmul.f32 %v438, %v437
        %v440 = vmul.f32 %v439, %v438
        %v441 = vmul.f32 0.5, %v440
        %v442 = vsub.f32 1.5, %v441
        %v443 = vmul.f32 %v438, %v442
        %vm444 = vweird.f32 %v437
        %vm445 = vweird.f32 %v438
        %vm446 = vmor %vm444, %vm445
        %v447 = vsel %vm446, %v438, %v443
        %v448 = vmul.f32 %v423, %v447
        %v449 = vperm.slane %v417, 0
        %v450 = vmul.f32 %v448, %v449
        %v451 = vpack.c.bf16 %v450, %v450
        %v452 = vld [vmem:[%s383] sm:$0xf]
        %v453 = vld [vmem:[%s383 + $0x4] sm:$0xf]
        %v454 = vld [vmem:[%s383 + $0x8] sm:$0xf]
        %v455 = vld [vmem:[%s383 + $0xc] sm:$0xf]
        %v456 = vld [vmem:[%s383 + $0x10] sm:$0xf]
        %v457 = vld [vmem:[%s383 + $0x14] sm:$0xf]
        %v458 = vld [vmem:[%s383 + $0x18] sm:$0xf]
        %v459 = vld [vmem:[%s383 + $0x1c] sm:$0xf]
        %v468 = vunpack.c.l.b16 %v452
        %v469 = vunpack.c.l.b16 %v453
        %v470 = vunpack.c.l.b16 %v454
        %v471 = vunpack.c.l.b16 %v455
        %v472 = vunpack.c.l.b16 %v456
        %v473 = vunpack.c.l.b16 %v457
        %v474 = vunpack.c.l.b16 %v458
        %v475 = vunpack.c.l.b16 %v459
        %v476 = vpack.c.b16 %v469, %v468
        %v477 = vpack.c.b16 %v471, %v470
        %v478 = vpack.c.b16 %v473, %v472
        %v479 = vpack.c.b16 %v475, %v474
        %v485 = vsel %vm425, %v451, 0
        %487 = vmatpush.bf16.msra.mxu0 0
        %488 = vmatpush.bf16.msra.mxu0 0
        %489 = vmatpush.bf16.msra.mxu0 0
        %490 = vmatpush.bf16.msra.mxu0 0
        %491 = vmatpush.bf16.msra.mxu0 %v479
        %492 = vmatpush.bf16.msra.mxu0 %v478
        %493 = vmatpush.bf16.msra.mxu0 %v477
        %494 = vmatpush.bf16.msra.mxu0 %v476
        %495 = vmatmul.bf16.gmra.mxu0 %v485
        %v496 = vpop.f32.mrf.mxu0
        %v497 = vadd.f32 0.0, %v496
        %v498 = vpop.f32.mrf.mxu0
        %499 = vdwg.mxu0
        %vm500 = vcmask 130048
        %v501 = vsel %vm500, %v497, 0.0
        %502 = vadd.xlane.f32.xlu0 %v501
        %v503 = vpop.xlane.xlu0 %502
        %v504 = vrcp.pop 16.0
        %v505 = vmul.f32 16.0, %v504
        %v506 = vsub.f32 1.0, %v505
        %v507 = vmul.f32 %v504, %v506
        %v508 = vadd.f32 %v504, %v507
        %vm509 = vweird.f32 %v504
        %v510 = vsel %vm509, %v504, %v508
        %v511 = vmul.f32 %v503, %v510
        %v512 = vsub.f32 %v497, %v511
        %v513 = vmul.f32 %v512, %v512
        %v514 = vsel %vm500, %v513, 0.0
        %515 = vadd.xlane.f32.xlu0 %v514
        %v516 = vpop.xlane.xlu0 %515
        %v517 = vmul.f32 %v516, %v510
        %v518 = vadd.f32 %v517, 1e-05
        %v519 = vrsqrt.pop %v518
        %v520 = vmul.f32 %v519, %v518
        %v521 = vmul.f32 %v520, %v519
        %v522 = vmul.f32 0.5, %v521
        %v523 = vsub.f32 1.5, %v522
        %v524 = vmul.f32 %v519, %v523
        %vm525 = vweird.f32 %v518
        %vm526 = vweird.f32 %v519
        %vm527 = vmor %vm525, %vm526
        %v528 = vsel %vm527, %v519, %v524
        %v529 = vmul.f32 %v512, %v528
        %531 = vrot.lane.b32.xlu0 %v497, 112
        %v532 = vpop.permute.xlu0 %531
        %v534 = vsel %vm500, %v532, 0.0
        %535 = vadd.xlane.f32.xlu0 %v534
        %v536 = vpop.xlane.xlu0 %535
        %v537 = vmul.f32 %v536, %v510
        %v538 = vsub.f32 %v497, %v537
        %v539 = vmul.f32 %v538, %v538
        %541 = vrot.lane.b32.xlu0 %v539, 112
        %v542 = vpop.permute.xlu0 %541
        %v544 = vsel %vm500, %v542, 0.0
        %545 = vadd.xlane.f32.xlu0 %v544
        %v546 = vpop.xlane.xlu0 %545
        %v547 = vmul.f32 %v546, %v510
        %v548 = vadd.f32 %v547, 1e-05
        %v549 = vrsqrt.pop %v548
        %v550 = vmul.f32 %v549, %v548
        %v551 = vmul.f32 %v550, %v549
        %v552 = vmul.f32 0.5, %v551
        %v553 = vsub.f32 1.5, %v552
        %v554 = vmul.f32 %v549, %v553
        %vm555 = vweird.f32 %v548
        %vm556 = vweird.f32 %v549
        %vm557 = vmor %vm555, %vm556
        %v558 = vsel %vm557, %v549, %v554
        %v559 = vmul.f32 %v538, %v558
        %560 = vrot.lane.b32.xlu0 %v497, 96
        %v561 = vpop.permute.xlu0 %560
        %v563 = vsel %vm500, %v561, 0.0
        %564 = vadd.xlane.f32.xlu0 %v563
        %v565 = vpop.xlane.xlu0 %564
        %v566 = vmul.f32 %v565, %v510
        %v567 = vsub.f32 %v497, %v566
        %v568 = vmul.f32 %v567, %v567
        %570 = vrot.lane.b32.xlu0 %v568, 96
        %v571 = vpop.permute.xlu0 %570
        %v573 = vsel %vm500, %v571, 0.0
        %574 = vadd.xlane.f32.xlu0 %v573
        %v575 = vpop.xlane.xlu0 %574
        %v576 = vmul.f32 %v575, %v510
        %v577 = vadd.f32 %v576, 1e-05
        %v578 = vrsqrt.pop %v577
        %v579 = vmul.f32 %v578, %v577
        %v580 = vmul.f32 %v579, %v578
        %v581 = vmul.f32 0.5, %v580
        %v582 = vsub.f32 1.5, %v581
        %v583 = vmul.f32 %v578, %v582
        %vm584 = vweird.f32 %v577
        %vm585 = vweird.f32 %v578
        %vm586 = vmor %vm584, %vm585
        %v587 = vsel %vm586, %v578, %v583
        %v588 = vmul.f32 %v567, %v587
        %589 = vrot.lane.b32.xlu0 %v497, 80
        %v590 = vpop.permute.xlu0 %589
        %v592 = vsel %vm500, %v590, 0.0
        %593 = vadd.xlane.f32.xlu0 %v592
        %v594 = vpop.xlane.xlu0 %593
        %v595 = vmul.f32 %v594, %v510
        %v596 = vsub.f32 %v497, %v595
        %v597 = vmul.f32 %v596, %v596
        %599 = vrot.lane.b32.xlu0 %v597, 80
        %v600 = vpop.permute.xlu0 %599
        %v602 = vsel %vm500, %v600, 0.0
        %603 = vadd.xlane.f32.xlu0 %v602
        %v604 = vpop.xlane.xlu0 %603
        %v605 = vmul.f32 %v604, %v510
        %v606 = vadd.f32 %v605, 1e-05
        %v607 = vrsqrt.pop %v606
        %v608 = vmul.f32 %v607, %v606
        %v609 = vmul.f32 %v608, %v607
        %v610 = vmul.f32 0.5, %v609
        %v611 = vsub.f32 1.5, %v610
        %v612 = vmul.f32 %v607, %v611
        %vm613 = vweird.f32 %v606
        %vm614 = vweird.f32 %v607
        %vm615 = vmor %vm613, %vm614
        %v616 = vsel %vm615, %v607, %v612
        %v617 = vmul.f32 %v596, %v616
        %619 = vrot.lane.b32.xlu0 %v559, 112
        %v620 = vpop.permute.xlu0 %619
        %623 = vrot.lane.b32.xlu0 %v588, 96
        %v624 = vpop.permute.xlu0 %623
        %627 = vrot.lane.b32.xlu0 %v617, 80
        %v628 = vpop.permute.xlu0 %627
        %631 = vst [vmem:[#allocation1] sm:$0xff] %v417
        %s632 = scalar_lea.vmem [#allocation1], 2
        %v633 = vld [vmem:[%s632] ss:$9 sm:$0xff]
        %s634 = scalar_lea.vmem [#allocation1], 3
        %v635 = vld [vmem:[%s634] ss:$9 sm:$0xff]
        %s636 = scalar_lea.vmem [#allocation1], 4
        %v637 = vld [vmem:[%s636] ss:$9 sm:$0xff]
        %s638 = scalar_lea.vmem [#allocation1], 5
        %v639 = vld [vmem:[%s638] ss:$9 sm:$0xff]
        %v640 = vperm.slane %v633, 0
        %v641 = vperm.slane %v635, 0
        %v642 = vperm.slane %v637, 0
        %v643 = vperm.slane %v639, 0
        %v648 = vmul.f32 %v529, %v640
        %v649 = vmul.f32 %v620, %v641
        %v650 = vmul.f32 %v624, %v642
        %v651 = vmul.f32 %v628, %v643
        %653 = vst [vmem:[#allocation1] sm:$0xff] %v417
        %s654 = scalar_lea.vmem [#allocation1], 6
        %v655 = vld [vmem:[%s654] ss:$9 sm:$0xff]
        %s656 = scalar_lea.vmem [#allocation1], 7
        %v657 = vld [vmem:[%s656] ss:$9 sm:$0xff]
        %658 = vst [vmem:[#allocation1] sm:$0xff] %v418
        %v659 = vld [vmem:[#allocation1] ss:$9 sm:$0xff]
        %s660 = scalar_lea.vmem [#allocation1], 1
        %v661 = vld [vmem:[%s660] ss:$9 sm:$0xff]
        %v662 = vperm.slane %v655, 0
        %v663 = vperm.slane %v657, 0
        %v664 = vperm.slane %v659, 0
        %v665 = vperm.slane %v661, 0
        %v670 = vadd.f32 %v648, %v662
        %v671 = vadd.f32 %v649, %v663
        %v672 = vadd.f32 %v650, %v664
        %v673 = vadd.f32 %v651, %v665
        %678 = vrot.lane.b32.xlu0 %v670, 120
        %v679 = vpop.permute.xlu0 %678
        %680 = vrot.lane.b32.xlu0 %v671, 120
        %v681 = vpop.permute.xlu0 %680
        %682 = vrot.lane.b32.xlu0 %v672, 120
        %v683 = vpop.permute.xlu0 %682
        %684 = vrot.lane.b32.xlu0 %v673, 120
        %v685 = vpop.permute.xlu0 %684
        %690 = vrot.lane.b32.xlu0 %v670, 8
        %v691 = vpop.permute.xlu0 %690
        %692 = vrot.lane.b32.xlu0 %v671, 8
        %v693 = vpop.permute.xlu0 %692
        %694 = vrot.lane.b32.xlu0 %v672, 8
        %v695 = vpop.permute.xlu0 %694
        %696 = vrot.lane.b32.xlu0 %v673, 8
        %v697 = vpop.permute.xlu0 %696
        %vm702 = vcmask 64512
        %v703 = vsel %vm702, %v679, %v691
        %v704 = vsel %vm702, %v681, %v693
        %v705 = vsel %vm702, %v683, %v695
        %v706 = vsel %vm702, %v685, %v697
        %v707 = vmul.f32 %v670, %v419
        %v708 = vmul.f32 %v671, %v419
        %v709 = vmul.f32 %v672, %v419
        %v710 = vmul.f32 %v673, %v419
        %v711 = vmul.f32 %v703, %v420
        %v712 = vmul.f32 %v704, %v420
        %v713 = vmul.f32 %v705, %v420
        %v714 = vmul.f32 %v706, %v420
        %v715 = vadd.f32 %v707, %v711
        %v716 = vadd.f32 %v708, %v712
        %v717 = vadd.f32 %v709, %v713
        %v718 = vadd.f32 %v710, %v714
        %v719 = vmul.f32 %v715, 0.25
        %v720 = vmul.f32 %v716, 0.25
        %v721 = vmul.f32 %v717, 0.25
        %v722 = vmul.f32 %v718, 0.25
        %723 = vrot.lane.b32.xlu0 %v497, 64
        %v724 = vpop.permute.xlu0 %723
        %v726 = vsel %vm500, %v724, 0.0
        %727 = vadd.xlane.f32.xlu0 %v726
        %v728 = vpop.xlane.xlu0 %727
        %v729 = vmul.f32 %v728, %v510
        %v730 = vsub.f32 %v497, %v729
        %v731 = vmul.f32 %v730, %v730
        %733 = vrot.lane.b32.xlu0 %v731, 64
        %v734 = vpop.permute.xlu0 %733
        %v736 = vsel %vm500, %v734, 0.0
        %737 = vadd.xlane.f32.xlu0 %v736
        %v738 = vpop.xlane.xlu0 %737
        %v739 = vmul.f32 %v738, %v510
        %v740 = vadd.f32 %v739, 1e-05
        %v741 = vrsqrt.pop %v740
        %v742 = vmul.f32 %v741, %v740
        %v743 = vmul.f32 %v742, %v741
        %v744 = vmul.f32 0.5, %v743
        %v745 = vsub.f32 1.5, %v744
        %v746 = vmul.f32 %v741, %v745
        %vm747 = vweird.f32 %v740
        %vm748 = vweird.f32 %v741
        %vm749 = vmor %vm747, %vm748
        %v750 = vsel %vm749, %v741, %v746
        %v751 = vmul.f32 %v730, %v750
        %752 = vrot.lane.b32.xlu0 %v497, 48
        %v753 = vpop.permute.xlu0 %752
        %v755 = vsel %vm500, %v753, 0.0
        %756 = vadd.xlane.f32.xlu0 %v755
        %v757 = vpop.xlane.xlu0 %756
        %v758 = vmul.f32 %v757, %v510
        %v759 = vsub.f32 %v497, %v758
        %v760 = vmul.f32 %v759, %v759
        %762 = vrot.lane.b32.xlu0 %v760, 48
        %v763 = vpop.permute.xlu0 %762
        %v765 = vsel %vm500, %v763, 0.0
        %766 = vadd.xlane.f32.xlu0 %v765
        %v767 = vpop.xlane.xlu0 %766
        %v768 = vmul.f32 %v767, %v510
        %v769 = vadd.f32 %v768, 1e-05
        %v770 = vrsqrt.pop %v769
        %v771 = vmul.f32 %v770, %v769
        %v772 = vmul.f32 %v771, %v770
        %v773 = vmul.f32 0.5, %v772
        %v774 = vsub.f32 1.5, %v773
        %v775 = vmul.f32 %v770, %v774
        %vm776 = vweird.f32 %v769
        %vm777 = vweird.f32 %v770
        %vm778 = vmor %vm776, %vm777
        %v779 = vsel %vm778, %v770, %v775
        %v780 = vmul.f32 %v759, %v779
        %782 = vrot.lane.b32.xlu0 %v780, 112
        %v783 = vpop.permute.xlu0 %782
        %785 = vst [vmem:[#allocation1] sm:$0xff] %v418
        %s786 = scalar_lea.vmem [#allocation1], 2
        %v787 = vld [vmem:[%s786] ss:$9 sm:$0xff]
        %s788 = scalar_lea.vmem [#allocation1], 3
        %v789 = vld [vmem:[%s788] ss:$9 sm:$0xff]
        %v790 = vperm.slane %v787, 0
        %v791 = vperm.slane %v789, 0
        %792 = vrot.lane.b32.xlu0 %v790, 64
        %v793 = vpop.permute.xlu0 %792
        %794 = vrot.lane.b32.xlu0 %v791, 64
        %v795 = vpop.permute.xlu0 %794
        %v798 = vmul.f32 %v751, %v793
        %v799 = vmul.f32 %v783, %v795
        %800 = vst [vmem:[#allocation1] sm:$0xff] %v418
        %s801 = scalar_lea.vmem [#allocation1], 4
        %v802 = vld [vmem:[%s801] ss:$9 sm:$0xff]
        %s803 = scalar_lea.vmem [#allocation1], 5
        %v804 = vld [vmem:[%s803] ss:$9 sm:$0xff]
        %v805 = vperm.slane %v802, 0
        %v806 = vperm.slane %v804, 0
        %807 = vrot.lane.b32.xlu0 %v805, 64
        %v808 = vpop.permute.xlu0 %807
        %809 = vrot.lane.b32.xlu0 %v806, 64
        %v810 = vpop.permute.xlu0 %809
        %v813 = vadd.f32 %v798, %v808
        %v814 = vadd.f32 %v799, %v810
        %817 = vrot.lane.b32.xlu0 %v813, 56
        %v818 = vpop.permute.xlu0 %817
        %819 = vrot.lane.b32.xlu0 %v814, 56
        %v820 = vpop.permute.xlu0 %819
        %823 = vrot.lane.b32.xlu0 %v813, 72
        %v824 = vpop.permute.xlu0 %823
        %825 = vrot.lane.b32.xlu0 %v814, 72
        %v826 = vpop.permute.xlu0 %825
        %v829 = vsel %vm702, %v818, %v824
        %v830 = vsel %vm702, %v820, %v826
        %832 = vrot.lane.b32.xlu0 %v419, 64
        %v833 = vpop.permute.xlu0 %832
        %v835 = vmul.f32 %v813, %v833
        %v836 = vmul.f32 %v814, %v833
        %v837 = vmul.f32 %v829, %v420
        %v838 = vmul.f32 %v830, %v420
        %841 = vrot.lane.b32.xlu0 %v837, 64
        %v842 = vpop.permute.xlu0 %841
        %843 = vrot.lane.b32.xlu0 %v838, 64
        %v844 = vpop.permute.xlu0 %843
        %v847 = vadd.f32 %v835, %v842
        %v848 = vadd.f32 %v836, %v844
        %v849 = vpack.c.bf16 %v719, %v719
        %v850 = vpack.c.bf16 %v720, %v720
        %v851 = vpack.c.bf16 %v721, %v721
        %v852 = vpack.c.bf16 %v722, %v722
        %v853 = vpack.c.bf16 %v847, %v847
        %v854 = vpack.c.bf16 %v848, %v848
        %v856 = vunpack.c.l.b16 %v853
        %v857 = vpack.c.b16 %v856, %v856
        %858 = vrot.lane.b32.xlu0 %v857, 64
        %v859 = vpop.permute.xlu0 %858
        %v861 = vsel %vm500, %v849, 0
        %v864 = vsel %vm500, %v859, 0
        %866 = vmatpush.bf16.xpose.msra.mxu0 0
        %867 = vmatpush.bf16.xpose.msra.mxu0 0
        %868 = vmatpush.bf16.xpose.msra.mxu0 0
        %869 = vmatpush.bf16.xpose.msra.mxu0 0
        %870 = vmatpush.bf16.xpose.msra.mxu0 0
        %871 = vmatpush.bf16.xpose.msra.mxu0 0
        %872 = vmatpush.bf16.xpose.msra.mxu0 0
        %873 = vmatpush.bf16.xpose.msra.mxu0 %v864
        %874 = vmatmul.bf16.gmra.mxu0 %v861
        %v875 = vpop.f32.mrf.mxu0
        %v876 = vadd.f32 0.0, %v875
        %v877 = vpop.f32.mrf.mxu0
        %878 = vdwg.mxu0
        %v880 = vsel %vm500, %v850, 0
        %882 = vmatpush.bf16.xpose.msra.mxu0 0
        %883 = vmatpush.bf16.xpose.msra.mxu0 0
        %884 = vmatpush.bf16.xpose.msra.mxu0 0
        %885 = vmatpush.bf16.xpose.msra.mxu0 0
        %886 = vmatpush.bf16.xpose.msra.mxu0 0
        %887 = vmatpush.bf16.xpose.msra.mxu0 0
        %888 = vmatpush.bf16.xpose.msra.mxu0 0
        %889 = vmatpush.bf16.xpose.msra.mxu0 %v864
        %890 = vmatmul.bf16.gmra.mxu0 %v880
        %v891 = vpop.f32.mrf.mxu0
        %v892 = vadd.f32 0.0, %v891
        %v893 = vpop.f32.mrf.mxu0
        %894 = vdwg.mxu0
        %v896 = vunpack.c.l.b16 %v854
        %v897 = vpack.c.b16 %v896, %v896
        %898 = vrot.lane.b32.xlu0 %v897, 64
        %v899 = vpop.permute.xlu0 %898
        %v901 = vsel %vm500, %v851, 0
        %v904 = vsel %vm500, %v899, 0
        %906 = vmatpush.bf16.xpose.msra.mxu0 0
        %907 = vmatpush.bf16.xpose.msra.mxu0 0
        %908 = vmatpush.bf16.xpose.msra.mxu0 0
        %909 = vmatpush.bf16.xpose.msra.mxu0 0
        %910 = vmatpush.bf16.xpose.msra.mxu0 0
        %911 = vmatpush.bf16.xpose.msra.mxu0 0
        %912 = vmatpush.bf16.xpose.msra.mxu0 0
        %913 = vmatpush.bf16.xpose.msra.mxu0 %v904
        %914 = vmatmul.bf16.gmra.mxu0 %v901
        %v915 = vpop.f32.mrf.mxu0
        %v916 = vadd.f32 0.0, %v915
        %v917 = vpop.f32.mrf.mxu0
        %918 = vdwg.mxu0
        %v920 = vsel %vm500, %v852, 0
        %922 = vmatpush.bf16.xpose.msra.mxu0 0
        %923 = vmatpush.bf16.xpose.msra.mxu0 0
        %924 = vmatpush.bf16.xpose.msra.mxu0 0
        %925 = vmatpush.bf16.xpose.msra.mxu0 0
        %926 = vmatpush.bf16.xpose.msra.mxu0 0
        %927 = vmatpush.bf16.xpose.msra.mxu0 0
        %928 = vmatpush.bf16.xpose.msra.mxu0 0
        %929 = vmatpush.bf16.xpose.msra.mxu0 %v904
        %930 = vmatmul.bf16.gmra.mxu0 %v920
        %v931 = vpop.f32.mrf.mxu0
        %v932 = vadd.f32 0.0, %v931
        %v933 = vpop.f32.mrf.mxu0
        %934 = vdwg.mxu0
        %v935 = vld [vmem:[#allocation4] sm:$0xff]
        %vm936 = vcmp.gt.f32.partialorder %v935, 0.0
        %v937 = vsel %vm936, 1, 0
        %vm938 = vcmp.eq.s32.totalorder %v937, 1
        %v939 = vsel %vm938, %v876, -2.3819763e+38
        %v940 = vsel %vm938, %v892, -2.3819763e+38
        %v941 = vsel %vm938, %v916, -2.3819763e+38
        %v942 = vsel %vm938, %v932, -2.3819763e+38
        %v943 = vsel %vm702, %v939, -inf
        %944 = vmax.xlane.f32.xlu0 %v943
        %v945 = vpop.xlane.xlu0 %944
        %v946 = vsel %vm702, %v940, -inf
        %947 = vmax.xlane.f32.xlu0 %v946
        %v948 = vpop.xlane.xlu0 %947
        %v949 = vsel %vm702, %v941, -inf
        %950 = vmax.xlane.f32.xlu0 %v949
        %v951 = vpop.xlane.xlu0 %950
        %v952 = vsel %vm702, %v942, -inf
        %953 = vmax.xlane.f32.xlu0 %v952
        %v954 = vpop.xlane.xlu0 %953
        %v955 = vsub.f32 %v939, %v945
        %v956 = vsub.f32 %v940, %v948
        %v957 = vsub.f32 %v941, %v951
        %v958 = vsub.f32 %v942, %v954
        %v959 = vmul.f32 %v955, 1.442695
        %v960 = vpow.pop %v959
        %v961 = vmul.f32 %v956, 1.442695
        %v962 = vpow.pop %v961
        %v963 = vmul.f32 %v957, 1.442695
        %v964 = vpow.pop %v963
        %v965 = vmul.f32 %v958, 1.442695
        %v966 = vpow.pop %v965
        %v967 = vsel %vm702, %v960, 0.0
        %968 = vadd.xlane.f32.xlu0 %v967
        %v969 = vpop.xlane.xlu0 %968
        %v970 = vsel %vm702, %v962, 0.0
        %971 = vadd.xlane.f32.xlu0 %v970
        %v972 = vpop.xlane.xlu0 %971
        %v973 = vsel %vm702, %v964, 0.0
        %974 = vadd.xlane.f32.xlu0 %v973
        %v975 = vpop.xlane.xlu0 %974
        %v976 = vsel %vm702, %v966, 0.0
        %977 = vadd.xlane.f32.xlu0 %v976
        %v978 = vpop.xlane.xlu0 %977
        %v979 = vrcp.pop %v969
        %v980 = vrcp.pop %v972
        %v981 = vrcp.pop %v975
        %v982 = vrcp.pop %v978
        %v983 = vmul.f32 %v960, %v979
        %v984 = vmul.f32 %v962, %v980
        %v985 = vmul.f32 %v964, %v981
        %v986 = vmul.f32 %v966, %v982
        %v987 = vpack.c.bf16 %v983, %v983
        %v988 = vpack.c.bf16 %v984, %v984
        %v989 = vpack.c.bf16 %v985, %v985
        %v990 = vpack.c.bf16 %v986, %v986
        %v991 = vpack.c.bf16 %v497, %v497
        %v992 = vpack.c.bf16 %v532, %v532
        %v994 = vunpack.c.l.b16 %v991
        %v995 = vpack.c.b16 %v994, %v994
        %996 = vrot.lane.b32.xlu0 %v995, 32
        %v997 = vpop.permute.xlu0 %996
        %v999 = vsel %vm702, %v987, 0
        %vm1001 = vcmask 1043456
        %v1003 = vsel %vm1001, %v997, 0
        %1005 = vmatpush.bf16.msra.mxu0 0
        %1006 = vmatpush.bf16.msra.mxu0 0
        %1007 = vmatpush.bf16.msra.mxu0 0
        %1008 = vmatpush.bf16.msra.mxu0 0
        %1009 = vmatpush.bf16.msra.mxu0 0
        %1010 = vmatpush.bf16.msra.mxu0 0
        %1011 = vmatpush.bf16.msra.mxu0 0
        %1012 = vmatpush.bf16.msra.mxu0 %v1003
        %1013 = vmatmul.bf16.gmra.mxu0 %v999
        %v1014 = vpop.f32.mrf.mxu0
        %v1015 = vadd.f32 0.0, %v1014
        %v1016 = vpop.f32.mrf.mxu0
        %1017 = vdwg.mxu0
        %v1019 = vsel %vm702, %v988, 0
        %1021 = vmatpush.bf16.msra.mxu0 0
        %1022 = vmatpush.bf16.msra.mxu0 0
        %1023 = vmatpush.bf16.msra.mxu0 0
        %1024 = vmatpush.bf16.msra.mxu0 0
        %1025 = vmatpush.bf16.msra.mxu0 0
        %1026 = vmatpush.bf16.msra.mxu0 0
        %1027 = vmatpush.bf16.msra.mxu0 0
        %1028 = vmatpush.bf16.msra.mxu0 %v1003
        %1029 = vmatmul.bf16.gmra.mxu0 %v1019
        %v1030 = vpop.f32.mrf.mxu0
        %v1031 = vadd.f32 0.0, %v1030
        %v1032 = vpop.f32.mrf.mxu0
        %1033 = vdwg.mxu0
        %v1035 = vunpack.c.l.b16 %v992
        %v1036 = vpack.c.b16 %v1035, %v1035
        %1037 = vrot.lane.b32.xlu0 %v1036, 32
        %v1038 = vpop.permute.xlu0 %1037
        %v1040 = vsel %vm702, %v989, 0
        %v1043 = vsel %vm1001, %v1038, 0
        %1045 = vmatpush.bf16.msra.mxu0 0
        %1046 = vmatpush.bf16.msra.mxu0 0
        %1047 = vmatpush.bf16.msra.mxu0 0
        %1048 = vmatpush.bf16.msra.mxu0 0
        %1049 = vmatpush.bf16.msra.mxu0 0
        %1050 = vmatpush.bf16.msra.mxu0 0
        %1051 = vmatpush.bf16.msra.mxu0 0
        %1052 = vmatpush.bf16.msra.mxu0 %v1043
        %1053 = vmatmul.bf16.gmra.mxu0 %v1040
        %v1054 = vpop.f32.mrf.mxu0
        %v1055 = vadd.f32 0.0, %v1054
        %v1056 = vpop.f32.mrf.mxu0
        %1057 = vdwg.mxu0
        %v1059 = vsel %vm702, %v990, 0
        %1061 = vmatpush.bf16.msra.mxu0 0
        %1062 = vmatpush.bf16.msra.mxu0 0
        %1063 = vmatpush.bf16.msra.mxu0 0
        %1064 = vmatpush.bf16.msra.mxu0 0
        %1065 = vmatpush.bf16.msra.mxu0 0
        %1066 = vmatpush.bf16.msra.mxu0 0
        %1067 = vmatpush.bf16.msra.mxu0 0
        %1068 = vmatpush.bf16.msra.mxu0 %v1043
        %1069 = vmatmul.bf16.gmra.mxu0 %v1059
        %v1070 = vpop.f32.mrf.mxu0
        %v1071 = vadd.f32 0.0, %v1070
        %v1072 = vpop.f32.mrf.mxu0
        %1073 = vdwg.mxu0
        %1075 = vrot.lane.b32.xlu0 %v1031, 16
        %v1076 = vpop.permute.xlu0 %1075
        %1079 = vrot.lane.b32.xlu0 %v1055, 32
        %v1080 = vpop.permute.xlu0 %1079
        %1083 = vrot.lane.b32.xlu0 %v1071, 48
        %v1084 = vpop.permute.xlu0 %1083
        %v1086 = vsel %vm500, %v1015, %v1076
        %vm1087 = vcmask 261120
        %v1088 = vsel %vm1087, %v1086, %v1080
        %vm1089 = vcmask 392192
        %v1090 = vsel %vm1089, %v1088, %v1084
        %v1091 = vpack.c.bf16 %v1090, %v1090
        %v1092 = vld [vmem:[%s388] sm:$0xf]
        %v1093 = vld [vmem:[%s388 + $0x4] sm:$0xf]
        %v1094 = vld [vmem:[%s388 + $0x8] sm:$0xf]
        %v1095 = vld [vmem:[%s388 + $0xc] sm:$0xf]
        %v1096 = vld [vmem:[%s388 + $0x10] sm:$0xf]
        %v1097 = vld [vmem:[%s388 + $0x14] sm:$0xf]
        %v1098 = vld [vmem:[%s388 + $0x18] sm:$0xf]
        %v1099 = vld [vmem:[%s388 + $0x1c] sm:$0xf]
        %v1108 = vunpack.c.l.b16 %v1092
        %v1109 = vunpack.c.l.b16 %v1093
        %v1110 = vunpack.c.l.b16 %v1094
        %v1111 = vunpack.c.l.b16 %v1095
        %v1112 = vunpack.c.l.b16 %v1096
        %v1113 = vunpack.c.l.b16 %v1097
        %v1114 = vunpack.c.l.b16 %v1098
        %v1115 = vunpack.c.l.b16 %v1099
        %v1116 = vpack.c.b16 %v1109, %v1108
        %v1117 = vpack.c.b16 %v1111, %v1110
        %v1118 = vpack.c.b16 %v1113, %v1112
        %v1119 = vpack.c.b16 %v1115, %v1114
        %v1125 = vsel %vm425, %v1091, 0
        %1127 = vmatpush.bf16.msra.mxu0 0
        %1128 = vmatpush.bf16.msra.mxu0 0
        %1129 = vmatpush.bf16.msra.mxu0 0
        %1130 = vmatpush.bf16.msra.mxu0 0
        %1131 = vmatpush.bf16.msra.mxu0 %v1119
        %1132 = vmatpush.bf16.msra.mxu0 %v1118
        %1133 = vmatpush.bf16.msra.mxu0 %v1117
        %1134 = vmatpush.bf16.msra.mxu0 %v1116
        %1135 = vmatmul.bf16.gmra.mxu0 %v1125
        %v1136 = vpop.f32.mrf.mxu0
        %v1137 = vadd.f32 %v423, %v1136
        %v1138 = vpop.f32.mrf.mxu0
        %1139 = vdwg.mxu0
        %v1140 = vmul.f32 %v1137, %v1137
        %v1141 = vsel %vm425, %v1140, 0.0
        %1142 = vadd.xlane.f32.xlu0 %v1141
        %v1143 = vpop.xlane.xlu0 %1142
        %v1144 = vmul.f32 %v1143, %v435
        %v1145 = vadd.f32 %v1144, 1e-06
        %v1146 = vrsqrt.pop %v1145
        %v1147 = vmul.f32 %v1146, %v1145
        %v1148 = vmul.f32 %v1147, %v1146
        %v1149 = vmul.f32 0.5, %v1148
        %v1150 = vsub.f32 1.5, %v1149
        %v1151 = vmul.f32 %v1146, %v1150
        %vm1152 = vweird.f32 %v1145
        %vm1153 = vweird.f32 %v1146
        %vm1154 = vmor %vm1152, %vm1153
        %v1155 = vsel %vm1154, %v1146, %v1151
        %v1156 = vmul.f32 %v1137, %v1155
        %v1157 = vperm.slane %v417, 1
        %v1158 = vmul.f32 %v1156, %v1157
        %v1159 = vpack.c.bf16 %v1158, %v1158
        %v1160 = vld [vmem:[%s393] sm:$0xff]
        %v1161 = vld [vmem:[%s393 + $0x8] sm:$0xff]
        %v1162 = vld [vmem:[%s393 + $0x10] sm:$0xff]
        %v1163 = vld [vmem:[%s393 + $0x18] sm:$0xff]
        %v1164 = vld [vmem:[%s393 + $0x20] sm:$0xff]
        %v1165 = vld [vmem:[%s393 + $0x28] sm:$0xff]
        %v1166 = vld [vmem:[%s393 + $0x30] sm:$0xff]
        %v1167 = vld [vmem:[%s393 + $0x38] sm:$0xff]
        %v1176 = vunpack.c.l.b16 %v1160
        %v1177 = vunpack.c.h.b16 %v1160
        %v1178 = vunpack.c.l.b16 %v1161
        %v1179 = vunpack.c.h.b16 %v1161
        %v1180 = vunpack.c.l.b16 %v1162
        %v1181 = vunpack.c.h.b16 %v1162
        %v1182 = vunpack.c.l.b16 %v1163
        %v1183 = vunpack.c.h.b16 %v1163
        %v1184 = vunpack.c.l.b16 %v1164
        %v1185 = vunpack.c.h.b16 %v1164
        %v1186 = vunpack.c.l.b16 %v1165
        %v1187 = vunpack.c.h.b16 %v1165
        %v1188 = vunpack.c.l.b16 %v1166
        %v1189 = vunpack.c.h.b16 %v1166
        %v1190 = vunpack.c.l.b16 %v1167
        %v1191 = vunpack.c.h.b16 %v1167
        %v1192 = vpack.c.b16 %v1178, %v1176
        %v1193 = vpack.c.b16 %v1179, %v1177
        %v1194 = vpack.c.b16 %v1182, %v1180
        %v1195 = vpack.c.b16 %v1183, %v1181
        %v1196 = vpack.c.b16 %v1186, %v1184
        %v1197 = vpack.c.b16 %v1187, %v1185
        %v1198 = vpack.c.b16 %v1190, %v1188
        %v1199 = vpack.c.b16 %v1191, %v1189
        %v1209 = vsel %vm425, %v1159, 0
        %1211 = vmatpush.bf16.msra.mxu0 0
        %1212 = vmatpush.bf16.msra.mxu0 0
        %1213 = vmatpush.bf16.msra.mxu0 0
        %1214 = vmatpush.bf16.msra.mxu0 0
        %1215 = vmatpush.bf16.msra.mxu0 %v1198
        %1216 = vmatpush.bf16.msra.mxu0 %v1196
        %1217 = vmatpush.bf16.msra.mxu0 %v1194
        %1218 = vmatpush.bf16.msra.mxu0 %v1192
        %1219 = vmatmul.bf16.gmra.mxu0 %v1209
        %v1220 = vpop.f32.mrf.mxu0
        %v1221 = vadd.f32 0.0, %v1220
        %v1222 = vpop.f32.mrf.mxu0
        %1223 = vdwg.mxu0
        %1224 = vmatpush.bf16.msra.mxu0 0
        %1225 = vmatpush.bf16.msra.mxu0 0
        %1226 = vmatpush.bf16.msra.mxu0 0
        %1227 = vmatpush.bf16.msra.mxu0 0
        %1228 = vmatpush.bf16.msra.mxu0 %v1199
        %1229 = vmatpush.bf16.msra.mxu0 %v1197
        %1230 = vmatpush.bf16.msra.mxu0 %v1195
        %1231 = vmatpush.bf16.msra.mxu0 %v1193
        %1232 = vmatmul.bf16.gmra.mxu0 %v1209
        %v1233 = vpop.f32.mrf.mxu0
        %v1234 = vadd.f32 0.0, %v1233
        %v1235 = vpop.f32.mrf.mxu0
        %1236 = vdwg.mxu0
        %v1237 = vxor.u32 %v1221, 2147483648
        %v1238 = vmul.f32 %v1237, 1.442695
        %v1239 = vpow.pop %v1238
        %v1240 = vadd.f32 %v1239, 1.0
        %v1241 = vrcp.pop %v1240
        %v1242 = vmul.f32 %v1240, %v1241
        %v1243 = vsub.f32 1.0, %v1242
        %v1244 = vmul.f32 %v1241, %v1243
        %v1245 = vadd.f32 %v1241, %v1244
        %vm1246 = vweird.f32 %v1240
        %vm1247 = vweird.f32 %v1241
        %vm1248 = vmor %vm1246, %vm1247
        %v1249 = vsel %vm1248, %v1241, %v1245
        %v1250 = vand.u32 2147483647, %v1240
        %vm1251 = vcmp.eq.f32.partialorder %v1250, 8.507059e+37
        %v1252 = vand.u32 %v1240, 2147483648
        %v1253 = vor.u32 1.1754944e-38, %v1252
        %v1254 = vsel %vm1251, %v1253, %v1249
        %v1255 = vmul.f32 1.0, %v1254
        %v1256 = vmul.f32 %v1221, %v1255
        %v1257 = vmul.f32 %v1256, %v1234
        %v1258 = vpack.c.bf16 %v1257, %v1257
        %v1259 = vld [vmem:[%s398] sm:$0xf]
        %v1260 = vld [vmem:[%s398 + $0x4] sm:$0xf]
        %v1261 = vld [vmem:[%s398 + $0x8] sm:$0xf]
        %v1262 = vld [vmem:[%s398 + $0xc] sm:$0xf]
        %v1263 = vld [vmem:[%s398 + $0x10] sm:$0xf]
        %v1264 = vld [vmem:[%s398 + $0x14] sm:$0xf]
        %v1265 = vld [vmem:[%s398 + $0x18] sm:$0xf]
        %v1266 = vld [vmem:[%s398 + $0x1c] sm:$0xf]
        %v1267 = vld [vmem:[%s398 + $0x20] sm:$0xf]
        %v1268 = vld [vmem:[%s398 + $0x24] sm:$0xf]
        %v1269 = vld [vmem:[%s398 + $0x28] sm:$0xf]
        %v1270 = vld [vmem:[%s398 + $0x2c] sm:$0xf]
        %v1271 = vld [vmem:[%s398 + $0x30] sm:$0xf]
        %v1272 = vld [vmem:[%s398 + $0x34] sm:$0xf]
        %v1273 = vld [vmem:[%s398 + $0x38] sm:$0xf]
        %v1274 = vld [vmem:[%s398 + $0x3c] sm:$0xf]
        %v1291 = vunpack.c.l.b16 %v1259
        %v1292 = vunpack.c.l.b16 %v1260
        %v1293 = vunpack.c.l.b16 %v1261
        %v1294 = vunpack.c.l.b16 %v1262
        %v1295 = vunpack.c.l.b16 %v1263
        %v1296 = vunpack.c.l.b16 %v1264
        %v1297 = vunpack.c.l.b16 %v1265
        %v1298 = vunpack.c.l.b16 %v1266
        %v1299 = vunpack.c.l.b16 %v1267
        %v1300 = vunpack.c.l.b16 %v1268
        %v1301 = vunpack.c.l.b16 %v1269
        %v1302 = vunpack.c.l.b16 %v1270
        %v1303 = vunpack.c.l.b16 %v1271
        %v1304 = vunpack.c.l.b16 %v1272
        %v1305 = vunpack.c.l.b16 %v1273
        %v1306 = vunpack.c.l.b16 %v1274
        %v1307 = vpack.c.b16 %v1292, %v1291
        %v1308 = vpack.c.b16 %v1294, %v1293
        %v1309 = vpack.c.b16 %v1296, %v1295
        %v1310 = vpack.c.b16 %v1298, %v1297
        %v1311 = vpack.c.b16 %v1300, %v1299
        %v1312 = vpack.c.b16 %v1302, %v1301
        %v1313 = vpack.c.b16 %v1304, %v1303
        %v1314 = vpack.c.b16 %v1306, %v1305
        %1323 = vmatpush.bf16.msra.mxu0 %v1314
        %1324 = vmatpush.bf16.msra.mxu0 %v1313
        %1325 = vmatpush.bf16.msra.mxu0 %v1312
        %1326 = vmatpush.bf16.msra.mxu0 %v1311
        %1327 = vmatpush.bf16.msra.mxu0 %v1310
        %1328 = vmatpush.bf16.msra.mxu0 %v1309
        %1329 = vmatpush.bf16.msra.mxu0 %v1308
        %1330 = vmatpush.bf16.msra.mxu0 %v1307
        %1331 = vmatmul.bf16.gmra.mxu0 %v1258
        %v1332 = vpop.f32.mrf.mxu0
        %v1333 = vadd.f32 0.0, %v1332
        %v1334 = vpop.f32.mrf.mxu0
        %1335 = vdwg.mxu0
        %1336 = vst.msk [vmem:[#allocation2] sm:$0xff] %vm425, %v1333
        %1337 = vst.msk [vmem:[#allocation3] sm:$0xff] %vm425, %v1137
        %p1338 = scmp.eq.s32.totalorder %s21, 1
        // Predicated region
        $region61: #{chameleon_forward.1} parent=55 // pred_check
          %p1339 = pneg %p1338
        $region62: #{chameleon_forward.1} parent=55 // pred_check_branch
          %1341 = sbr.rel (%p1339) target = $region64
        $region63: #{chameleon_forward.1} parent=55 // pred_region
          %v1342 = vadd.f32 %v1333, %v1137
          %v1343 = vld [vmem:[%s8] sm:$0x1]
          %v1344 = vmul.f32 %v1342, %v1342
          %v1345 = vsel %vm425, %v1344, 0.0
          %1346 = vadd.xlane.f32.xlu0 %v1345
          %v1347 = vpop.xlane.xlu0 %1346
          %v1348 = vmul.f32 %v1347, %v435
          %v1349 = vadd.f32 %v1348, 1e-06
          %v1350 = vrsqrt.pop %v1349
          %v1351 = vmul.f32 %v1350, %v1349
          %v1352 = vmul.f32 %v1351, %v1350
          %v1353 = vmul.f32 0.5, %v1352
          %v1354 = vsub.f32 1.5, %v1353
          %v1355 = vmul.f32 %v1350, %v1354
          %vm1356 = vweird.f32 %v1349
          %vm1357 = vweird.f32 %v1350
          %vm1358 = vmor %vm1356, %vm1357
          %v1359 = vsel %vm1358, %v1350, %v1355
          %v1360 = vmul.f32 %v1342, %v1359
          %v1362 = vperm.slane %v1343, 0
          %v1364 = vmul.f32 %v1360, %v1362
          %1365 = vst.msk [vmem:[#allocation5] sm:$0xff] %vm425, %v1364
        $region64: #{chameleon_forward.1} parent=55 // pred_fallthru
          _
        // Predicated region
        $region65: #{chameleon_forward.1} parent=55 // pred_check
          %p1366 = pneg %p248
        $region66: #{chameleon_forward.1} parent=55 // pred_check_branch
          %1368 = sbr.rel (%p1366) target = $region68
        $region67: #{chameleon_forward.1} parent=55 // pred_region
          %1370 = vsyncadd [#allocation6], 0
          %s1372 = sshll.u32 [#allocation5], 4
          %s1373 = int_to_ptr.vmem [resolvable:$true] %s1372
          %s1374 = sshll.u32 %s9, 4
          %s1375 = int_to_ptr.hbm [resolvable:$true] %s1374
          %1377 = dma.vmem_to_hbm [thread:$0]  %s1373, 128, %s1375, [#allocation6]
        $region68: #{chameleon_forward.1} parent=55 // pred_fallthru
          _
        // Predicated region
        $region69: #{chameleon_forward.1} parent=55 // pred_check
          %p1378 = pneg %p248
        $region70: #{chameleon_forward.1} parent=55 // pred_check_branch
          %1380 = sbr.rel (%p1378) target = $region72
        $region71: #{chameleon_forward.1} parent=55 // pred_region
          %1382 = dma.done [#allocation6], 128
        $region72: #{chameleon_forward.1} parent=55 // pred_fallthru
          _
      $region56: #{chameleon_forward.1} parent=5 // pred_fallthru
        _
      %p1383 = scmp.le.s32.totalorder 2, %s16
      // Predicated region
      $region73: #{chameleon_forward.1} parent=5 // pred_check
        %p1384 = pneg %p1383
      $region74: #{chameleon_forward.1} parent=5 // pred_check_branch
        %1386 = sbr.rel (%p1384) target = $region76
      $region75: #{chameleon_forward.1} parent=5 // pred_region
        %s1387 = ssub.s32 %s16, 2
      $region76: #{chameleon_forward.1} parent=5 // pred_fallthru
        _
    $region6: #{chameleon_forward.1} parent=1 // loop_footer
      %s20 = sadd.s32 1, %s16
    $region7: #{chameleon_forward.1} parent=1 // loop_footer_branch
      %15 = sbr.rel target = $region3
    $region8: #{chameleon_forward.1} parent=1 // loop_exit
      _
    %1388 = vsyncpa [#allocation6], 1
    %s1389 = scalar_lea.sflag [#allocation6], 1
    %1390 = vsyncpa %s1389, 1

</llo_original>
